<compile_context>
chip_gen: v5e
topology: v5e:2x2
jax: 0.10.0
libtpu: 0.0.40
codegen_flags: <defaults>
</compile_context>

<pallas_src>
import functools

import jax
import jax.numpy as jnp
from jax import lax
from jax.experimental import pallas as pl
from jax.experimental.pallas import tpu as pltpu

EPS = 1e-5                      # nn.BatchNorm2d default eps
LANES = 128                     # TPU lane width: pad Cout to a multiple of this
VMEM_LIMIT = 64 * 1024 * 1024   # raise default scoped-VMEM limit (fits all gens)


def _round_up(x, m):
    return (x + m - 1) // m * m


def _pick_block_rows(hu, wu, cout_p, max_rows=64, tile_budget=2 * 1024 * 1024):
    """Largest divisor of hu (<= max_rows) whose f32 output tile fits the budget."""
    best = 1
    for th in range(1, min(hu, max_rows) + 1):
        if hu % th == 0 and th * wu * cout_p * 4 <= tile_budget:
            best = th
    return best


# --------------------- pass 1: conv (9 shifted matmuls) + batch statistics ---

def _make_conv_stats_kernel(th, wu, cin, cout_p, kh, kw):
    def kernel(xp_ref, w_ref, y_ref, sum_ref, ssq_ref):
        # xp_ref : (1, Hp, Wp, Cin)     padded image, resident across row tiles
        # w_ref  : (kh*kw, Cin, Cout_p) resident weights
        # y_ref  : (1, th, wu, Cout_p)  conv output tile (pre-BN)
        # sum_ref/ssq_ref : (1, 1, Cout_p) per-image channel sums (revisited)
        r = pl.program_id(1)
        h0 = pl.multiple_of(r * th, th)

        # One VMEM read of the halo rows; the 9 taps are value-domain slices.
        halo = xp_ref[0, pl.ds(h0, th + kh - 1), :, :]        # (th+2, Wp, Cin)

        acc = jnp.zeros((th * wu, cout_p), jnp.float32)
        for i in range(kh):
            for j in range(kw):
                x2d = halo[i:i + th, j:j + wu, :].reshape(th * wu, cin)
                acc = acc + jnp.dot(x2d, w_ref[i * kw + j],
                                    preferred_element_type=jnp.float32)

        y_ref[...] = acc.reshape(1, th, wu, cout_p)

        @pl.when(r == 0)
        def _():
            sum_ref[...] = jnp.zeros_like(sum_ref)
            ssq_ref[...] = jnp.zeros_like(ssq_ref)

        # Column reductions ride the XLU slot while MXU/DMA are the bottleneck.
        sum_ref[...] = sum_ref[...] + jnp.sum(
            acc, axis=0, keepdims=True).reshape(1, 1, cout_p)
        ssq_ref[...] = ssq_ref[...] + jnp.sum(
            acc * acc, axis=0, keepdims=True).reshape(1, 1, cout_p)

    return kernel


# --------------------- pass 2: folded BN affine + ReLU (elementwise) ---------

def _bn_relu_kernel(y_ref, scale_ref, shift_ref, o_ref):
    o_ref[...] = jnp.maximum(y_ref[...] * scale_ref[...] + shift_ref[...], 0.0)


# ------------------------------------- wrapper -------------------------------

def up_block(x_nchw, weight, gamma, beta, *, scale_factor=2, block_rows=None,
             conv_dtype=jnp.float32):
    """UpBlock forward.  NCHW in / NCHW out, float32.

    x_nchw: (N, Cin, H, W); weight: (Cout, Cin, 3, 3); gamma/beta: (Cout,)
    """
    n, cin, h, w = x_nchw.shape
    cout, _, kh, kw = weight.shape
    assert kh % 2 == 1 and kw % 2 == 1
    ph, pw = kh // 2, kw // 2

    hu, wu = h * scale_factor, w * scale_factor
    cout_p = _round_up(cout, LANES)

    # --- wrapper glue: NCHW -> NHWC, nearest upsample, spatial pad ----------
    # (kept in XLA; the module interface is NCHW.  Fusing the nearest repeat
    #  into the kernel's input slicing would save another ~scale^2 x of input
    #  HBM traffic.)
    x = jnp.transpose(x_nchw, (0, 2, 3, 1))                       # (N, H, W, Cin)
    x = jnp.repeat(jnp.repeat(x, scale_factor, axis=1), scale_factor, axis=2)
    xp = jnp.pad(x, ((0, 0), (ph, ph), (pw, pw), (0, 0))).astype(conv_dtype)
    hp, wp = hu + 2 * ph, wu + 2 * pw

    # weights: (Cout, Cin, KH, KW) -> (KH*KW, Cin, Cout_p), zero-padded channels
    w_mat = jnp.transpose(weight, (2, 3, 1, 0)).reshape(kh * kw, cin, cout)
    w_mat = jnp.pad(w_mat, ((0, 0), (0, 0), (0, cout_p - cout))).astype(conv_dtype)

    assert wu % 8 == 0, "upsampled width must be a multiple of 8 (sublane)"
    # TODO(synk): general (non multiple-of-8) upsampled widths need a masked /
    # relayout path for the in-kernel (th, wu, cin) -> (th*wu, cin) flatten.

    th = block_rows if block_rows is not None else _pick_block_rows(hu, wu, cout_p)
    assert hu % th == 0
    grid_h = hu // th

    conv_kernel = _make_conv_stats_kernel(th, wu, cin, cout_p, kh, kw)
    y, sums, ssqs = pl.pallas_call(
        conv_kernel,
        grid=(n, grid_h),
        in_specs=[
            # padded image: index constant along the row axis -> fetched once/image
            pl.BlockSpec((1, hp, wp, cin), lambda b, r: (b, 0, 0, 0)),
            # weights resident in VMEM for the whole grid
            pl.BlockSpec((kh * kw, cin, cout_p), lambda b, r: (0, 0, 0)),
        ],
        out_specs=(
            pl.BlockSpec((1, th, wu, cout_p), lambda b, r: (b, r, 0, 0)),
            pl.BlockSpec((1, 1, cout_p), lambda b, r: (b, 0, 0)),
            pl.BlockSpec((1, 1, cout_p), lambda b, r: (b, 0, 0)),
        ),
        out_shape=(
            jax.ShapeDtypeStruct((n, hu, wu, cout_p), jnp.float32),
            jax.ShapeDtypeStruct((n, 1, cout_p), jnp.float32),
            jax.ShapeDtypeStruct((n, 1, cout_p), jnp.float32),
        ),
        compiler_params=pltpu.CompilerParams(
            dimension_semantics=("parallel", "arbitrary"),
            vmem_limit_bytes=VMEM_LIMIT),
    )(xp, w_mat)

    # --- finalize BN statistics and fold the affine (tiny per-channel math) --
    # f32 sum / sum-of-squares; var clamped at 0 to guard E[x^2]-E[x]^2
    # cancellation (for very large M a compensated / Welford merge is safer).
    m_count = n * hu * wu
    mean = jnp.sum(sums, axis=(0, 1)) / m_count                    # (Cout_p,)
    var = jnp.maximum(jnp.sum(ssqs, axis=(0, 1)) / m_count - mean * mean, 0.0)
    gamma_p = jnp.pad(gamma.astype(jnp.float32), (0, cout_p - cout))
    beta_p = jnp.pad(beta.astype(jnp.float32), (0, cout_p - cout))
    scale = gamma_p * lax.rsqrt(var + EPS)
    shift = beta_p - mean * scale
    scale4 = scale.reshape(1, 1, 1, cout_p)
    shift4 = shift.reshape(1, 1, 1, cout_p)

    out_p = pl.pallas_call(
        _bn_relu_kernel,
        grid=(n, grid_h),
        in_specs=[
            pl.BlockSpec((1, th, wu, cout_p), lambda b, r: (b, r, 0, 0)),
            pl.BlockSpec((1, 1, 1, cout_p), lambda b, r: (0, 0, 0, 0)),
            pl.BlockSpec((1, 1, 1, cout_p), lambda b, r: (0, 0, 0, 0)),
        ],
        out_specs=pl.BlockSpec((1, th, wu, cout_p), lambda b, r: (b, r, 0, 0)),
        out_shape=jax.ShapeDtypeStruct((n, hu, wu, cout_p), jnp.float32),
        input_output_aliases={0: 0},    # normalize y in place (no extra HBM buffer)
        compiler_params=pltpu.CompilerParams(
            dimension_semantics=("parallel", "parallel"),
            vmem_limit_bytes=VMEM_LIMIT),
    )(y, scale4, shift4)

    # --- drop channel padding, back to NCHW ----------------------------------
    return jnp.transpose(out_p[..., :cout], (0, 3, 1, 2))


# ------------------------------------ reference ------------------------------

def _reference(x_nchw, weight, gamma, beta, scale_factor=2):
    """Pure-JAX reference: nearest upsample + conv + training-mode BN + ReLU."""
    x_up = jnp.repeat(jnp.repeat(x_nchw, scale_factor, axis=2), scale_factor, axis=3)
    y = lax.conv_general_dilated(
        x_up, weight, window_strides=(1, 1), padding=((1, 1), (1, 1)),
        dimension_numbers=("NCHW", "OIHW", "NCHW"))
    mean = jnp.mean(y, axis=(0, 2, 3), keepdims=True)
    var = jnp.mean((y - mean) ** 2, axis=(0, 2, 3), keepdims=True)
    yn = (y - mean) * lax.rsqrt(var + EPS)
    yn = yn * gamma.reshape(1, -1, 1, 1) + beta.reshape(1, -1, 1, 1)
    return jnp.maximum(yn, 0.0)


if __name__ == "__main__":
    key = jax.random.PRNGKey(0)
    k_x, k_w, k_g, k_b = jax.random.split(key, 4)

    N, Cin, Cout, H, W = 2, 4, 8, 16, 16
    x = jax.random.normal(k_x, (N, Cin, H, W), dtype=jnp.float32)
    weight = 0.1 * jax.random.normal(k_w, (Cout, Cin, 3, 3), dtype=jnp.float32)
    gamma = 1.0 + 0.05 * jax.random.normal(k_g, (Cout,), dtype=jnp.float32)
    beta = 0.05 * jax.random.normal(k_b, (Cout,), dtype=jnp.float32)

    # block_rows=8 -> grid = (2, 4): exercises the multi-step stats accumulation.
    fwd = jax.jit(functools.partial(up_block, scale_factor=2, block_rows=8))
    out = jax.block_until_ready(fwd(x, weight, gamma, beta))

    ref = jax.block_until_ready(_reference(x, weight, gamma, beta, 2))
    assert out.shape == (N, Cout, 2 * H, 2 * W), out.shape
    err = float(jnp.max(jnp.abs(out - ref)))
    assert jnp.allclose(out, ref, atol=1e-4, rtol=1e-4), f"mismatch vs reference: {err}"

    print("KERNEL_OK")
</pallas_src>

<mosaic_0001>
module attributes {stable_mosaic.version = 11 : i64} {
  func.func @kernel(%arg0: i32, %arg1: i32, %arg2: memref<1x34x34x4xf32, #tpu.memory_space<vmem>>, %arg3: memref<9x4x128xf32, #tpu.memory_space<vmem>>, %arg4: memref<1x8x32x128xf32, #tpu.memory_space<vmem>>, %arg5: memref<1x1x128xf32, #tpu.memory_space<vmem>>, %arg6: memref<1x1x128xf32, #tpu.memory_space<vmem>>) attributes {dimension_semantics = [#tpu.dimension_semantics<parallel>, #tpu.dimension_semantics<arbitrary>], iteration_bounds = array<i64: 2, 4>, scalar_prefetch = 0 : i64, scratch_operands = 0 : i64, tpu.core_type = #tpu.core_type<tc>, window_params = [{transform_indices = @transform_0, window_bounds = array<i64: 1, 34, 34, 4>}, {pipeline_mode = #tpu.pipeline_mode<synchronous>, transform_indices = @transform_1, window_bounds = array<i64: 9, 4, 128>}, {transform_indices = @transform_2, window_bounds = array<i64: 1, 8, 32, 128>}, {transform_indices = @transform_3, window_bounds = array<i64: 1, 1, 128>}, {transform_indices = @transform_4, window_bounds = array<i64: 1, 1, 128>}]} {
    %c8_i32 = arith.constant 8 : i32
    %0 = arith.muli %arg1, %c8_i32 : i32
    %1 = tpu.assume_multiple %0, 8 : i32
    %c0 = arith.constant 0 : index
    %2 = arith.index_cast %1 : i32 to index
    %c0_0 = arith.constant 0 : index
    %c0_1 = arith.constant 0 : index
    %3 = vector.load %arg2[%c0, %2, %c0_0, %c0_1] : memref<1x34x34x4xf32, #tpu.memory_space<vmem>>, vector<1x10x34x4xf32>
    %4 = vector.shape_cast %3 : vector<1x10x34x4xf32> to vector<10x34x4xf32>
    %cst = arith.constant 0.000000e+00 : f32
    %5 = vector.broadcast %cst : f32 to vector<256x128xf32>
    %6 = vector.extract_strided_slice %4 {offsets = [0, 0, 0], sizes = [8, 32, 4], strides = [1, 1, 1]} : vector<10x34x4xf32> to vector<8x32x4xf32>
    %7 = vector.shape_cast %6 : vector<8x32x4xf32> to vector<256x4xf32>
    %c0_2 = arith.constant 0 : index
    %c0_3 = arith.constant 0 : index
    %c0_4 = arith.constant 0 : index
    %8 = vector.load %arg3[%c0_2, %c0_3, %c0_4] : memref<9x4x128xf32, #tpu.memory_space<vmem>>, vector<1x4x128xf32>
    %9 = vector.shape_cast %8 : vector<1x4x128xf32> to vector<4x128xf32>
    %cst_5 = arith.constant dense<0.000000e+00> : vector<256x128xf32>
    %10 = tpu.matmul %7, %9, %cst_5 {dimension_numbers = #tpu.dot_dimension_numbers<[1], [0], [0], [1], [0, 0, 1, 1], [], []>} : vector<256x4xf32>, vector<4x128xf32>, vector<256x128xf32> -> vector<256x128xf32>
    %11 = arith.addf %5, %10 : vector<256x128xf32>
    %12 = vector.extract_strided_slice %4 {offsets = [0, 1, 0], sizes = [8, 32, 4], strides = [1, 1, 1]} : vector<10x34x4xf32> to vector<8x32x4xf32>
    %13 = vector.shape_cast %12 : vector<8x32x4xf32> to vector<256x4xf32>
    %c1 = arith.constant 1 : index
    %c0_6 = arith.constant 0 : index
    %c0_7 = arith.constant 0 : index
    %14 = vector.load %arg3[%c1, %c0_6, %c0_7] : memref<9x4x128xf32, #tpu.memory_space<vmem>>, vector<1x4x128xf32>
    %15 = vector.shape_cast %14 : vector<1x4x128xf32> to vector<4x128xf32>
    %cst_8 = arith.constant dense<0.000000e+00> : vector<256x128xf32>
    %16 = tpu.matmul %13, %15, %cst_8 {dimension_numbers = #tpu.dot_dimension_numbers<[1], [0], [0], [1], [0, 0, 1, 1], [], []>} : vector<256x4xf32>, vector<4x128xf32>, vector<256x128xf32> -> vector<256x128xf32>
    %17 = arith.addf %11, %16 : vector<256x128xf32>
    %18 = vector.extract_strided_slice %4 {offsets = [0, 2, 0], sizes = [8, 32, 4], strides = [1, 1, 1]} : vector<10x34x4xf32> to vector<8x32x4xf32>
    %19 = vector.shape_cast %18 : vector<8x32x4xf32> to vector<256x4xf32>
    %c2 = arith.constant 2 : index
    %c0_9 = arith.constant 0 : index
    %c0_10 = arith.constant 0 : index
    %20 = vector.load %arg3[%c2, %c0_9, %c0_10] : memref<9x4x128xf32, #tpu.memory_space<vmem>>, vector<1x4x128xf32>
    %21 = vector.shape_cast %20 : vector<1x4x128xf32> to vector<4x128xf32>
    %cst_11 = arith.constant dense<0.000000e+00> : vector<256x128xf32>
    %22 = tpu.matmul %19, %21, %cst_11 {dimension_numbers = #tpu.dot_dimension_numbers<[1], [0], [0], [1], [0, 0, 1, 1], [], []>} : vector<256x4xf32>, vector<4x128xf32>, vector<256x128xf32> -> vector<256x128xf32>
    %23 = arith.addf %17, %22 : vector<256x128xf32>
    %24 = vector.extract_strided_slice %4 {offsets = [1, 0, 0], sizes = [8, 32, 4], strides = [1, 1, 1]} : vector<10x34x4xf32> to vector<8x32x4xf32>
    %25 = vector.shape_cast %24 : vector<8x32x4xf32> to vector<256x4xf32>
    %c3 = arith.constant 3 : index
    %c0_12 = arith.constant 0 : index
    %c0_13 = arith.constant 0 : index
    %26 = vector.load %arg3[%c3, %c0_12, %c0_13] : memref<9x4x128xf32, #tpu.memory_space<vmem>>, vector<1x4x128xf32>
    %27 = vector.shape_cast %26 : vector<1x4x128xf32> to vector<4x128xf32>
    %cst_14 = arith.constant dense<0.000000e+00> : vector<256x128xf32>
    %28 = tpu.matmul %25, %27, %cst_14 {dimension_numbers = #tpu.dot_dimension_numbers<[1], [0], [0], [1], [0, 0, 1, 1], [], []>} : vector<256x4xf32>, vector<4x128xf32>, vector<256x128xf32> -> vector<256x128xf32>
    %29 = arith.addf %23, %28 : vector<256x128xf32>
    %30 = vector.extract_strided_slice %4 {offsets = [1, 1, 0], sizes = [8, 32, 4], strides = [1, 1, 1]} : vector<10x34x4xf32> to vector<8x32x4xf32>
    %31 = vector.shape_cast %30 : vector<8x32x4xf32> to vector<256x4xf32>
    %c4 = arith.constant 4 : index
    %c0_15 = arith.constant 0 : index
    %c0_16 = arith.constant 0 : index
    %32 = vector.load %arg3[%c4, %c0_15, %c0_16] : memref<9x4x128xf32, #tpu.memory_space<vmem>>, vector<1x4x128xf32>
    %33 = vector.shape_cast %32 : vector<1x4x128xf32> to vector<4x128xf32>
    %cst_17 = arith.constant dense<0.000000e+00> : vector<256x128xf32>
    %34 = tpu.matmul %31, %33, %cst_17 {dimension_numbers = #tpu.dot_dimension_numbers<[1], [0], [0], [1], [0, 0, 1, 1], [], []>} : vector<256x4xf32>, vector<4x128xf32>, vector<256x128xf32> -> vector<256x128xf32>
    %35 = arith.addf %29, %34 : vector<256x128xf32>
    %36 = vector.extract_strided_slice %4 {offsets = [1, 2, 0], sizes = [8, 32, 4], strides = [1, 1, 1]} : vector<10x34x4xf32> to vector<8x32x4xf32>
    %37 = vector.shape_cast %36 : vector<8x32x4xf32> to vector<256x4xf32>
    %c5 = arith.constant 5 : index
    %c0_18 = arith.constant 0 : index
    %c0_19 = arith.constant 0 : index
    %38 = vector.load %arg3[%c5, %c0_18, %c0_19] : memref<9x4x128xf32, #tpu.memory_space<vmem>>, vector<1x4x128xf32>
    %39 = vector.shape_cast %38 : vector<1x4x128xf32> to vector<4x128xf32>
    %cst_20 = arith.constant dense<0.000000e+00> : vector<256x128xf32>
    %40 = tpu.matmul %37, %39, %cst_20 {dimension_numbers = #tpu.dot_dimension_numbers<[1], [0], [0], [1], [0, 0, 1, 1], [], []>} : vector<256x4xf32>, vector<4x128xf32>, vector<256x128xf32> -> vector<256x128xf32>
    %41 = arith.addf %35, %40 : vector<256x128xf32>
    %42 = vector.extract_strided_slice %4 {offsets = [2, 0, 0], sizes = [8, 32, 4], strides = [1, 1, 1]} : vector<10x34x4xf32> to vector<8x32x4xf32>
    %43 = vector.shape_cast %42 : vector<8x32x4xf32> to vector<256x4xf32>
    %c6 = arith.constant 6 : index
    %c0_21 = arith.constant 0 : index
    %c0_22 = arith.constant 0 : index
    %44 = vector.load %arg3[%c6, %c0_21, %c0_22] : memref<9x4x128xf32, #tpu.memory_space<vmem>>, vector<1x4x128xf32>
    %45 = vector.shape_cast %44 : vector<1x4x128xf32> to vector<4x128xf32>
    %cst_23 = arith.constant dense<0.000000e+00> : vector<256x128xf32>
    %46 = tpu.matmul %43, %45, %cst_23 {dimension_numbers = #tpu.dot_dimension_numbers<[1], [0], [0], [1], [0, 0, 1, 1], [], []>} : vector<256x4xf32>, vector<4x128xf32>, vector<256x128xf32> -> vector<256x128xf32>
    %47 = arith.addf %41, %46 : vector<256x128xf32>
    %48 = vector.extract_strided_slice %4 {offsets = [2, 1, 0], sizes = [8, 32, 4], strides = [1, 1, 1]} : vector<10x34x4xf32> to vector<8x32x4xf32>
    %49 = vector.shape_cast %48 : vector<8x32x4xf32> to vector<256x4xf32>
    %c7 = arith.constant 7 : index
    %c0_24 = arith.constant 0 : index
    %c0_25 = arith.constant 0 : index
    %50 = vector.load %arg3[%c7, %c0_24, %c0_25] : memref<9x4x128xf32, #tpu.memory_space<vmem>>, vector<1x4x128xf32>
    %51 = vector.shape_cast %50 : vector<1x4x128xf32> to vector<4x128xf32>
    %cst_26 = arith.constant dense<0.000000e+00> : vector<256x128xf32>
    %52 = tpu.matmul %49, %51, %cst_26 {dimension_numbers = #tpu.dot_dimension_numbers<[1], [0], [0], [1], [0, 0, 1, 1], [], []>} : vector<256x4xf32>, vector<4x128xf32>, vector<256x128xf32> -> vector<256x128xf32>
    %53 = arith.addf %47, %52 : vector<256x128xf32>
    %54 = vector.extract_strided_slice %4 {offsets = [2, 2, 0], sizes = [8, 32, 4], strides = [1, 1, 1]} : vector<10x34x4xf32> to vector<8x32x4xf32>
    %55 = vector.shape_cast %54 : vector<8x32x4xf32> to vector<256x4xf32>
    %c8 = arith.constant 8 : index
    %c0_27 = arith.constant 0 : index
    %c0_28 = arith.constant 0 : index
    %56 = vector.load %arg3[%c8, %c0_27, %c0_28] : memref<9x4x128xf32, #tpu.memory_space<vmem>>, vector<1x4x128xf32>
    %57 = vector.shape_cast %56 : vector<1x4x128xf32> to vector<4x128xf32>
    %cst_29 = arith.constant dense<0.000000e+00> : vector<256x128xf32>
    %58 = tpu.matmul %55, %57, %cst_29 {dimension_numbers = #tpu.dot_dimension_numbers<[1], [0], [0], [1], [0, 0, 1, 1], [], []>} : vector<256x4xf32>, vector<4x128xf32>, vector<256x128xf32> -> vector<256x128xf32>
    %59 = arith.addf %53, %58 : vector<256x128xf32>
    %60 = vector.shape_cast %59 : vector<256x128xf32> to vector<1x8x32x128xf32>
    %c0_30 = arith.constant 0 : index
    %c0_31 = arith.constant 0 : index
    %c0_32 = arith.constant 0 : index
    %c0_33 = arith.constant 0 : index
    %61 = vector.load %arg4[%c0_30, %c0_31, %c0_32, %c0_33] : memref<1x8x32x128xf32, #tpu.memory_space<vmem>>, vector<1x8x32x128xf32>
    tpu.vector_store %arg4[%c0_30, %c0_31, %c0_32, %c0_33], %60 {strides = array<i32>} : memref<1x8x32x128xf32, #tpu.memory_space<vmem>>, vector<1x8x32x128xf32>,
    %c0_i32 = arith.constant 0 : i32
    %62 = arith.cmpi eq, %arg1, %c0_i32 : i32
    %63 = arith.extui %62 : i1 to i32
    %c0_i32_34 = arith.constant 0 : i32
    %64 = arith.cmpi ne, %63, %c0_i32_34 : i32
    scf.if %64 {
      %cst_49 = arith.constant 0.000000e+00 : f32
      %78 = vector.broadcast %cst_49 : f32 to vector<1x1x128xf32>
      %c0_50 = arith.constant 0 : index
      %c0_51 = arith.constant 0 : index
      %c0_52 = arith.constant 0 : index
      %79 = vector.load %arg5[%c0_50, %c0_51, %c0_52] : memref<1x1x128xf32, #tpu.memory_space<vmem>>, vector<1x1x128xf32>
      tpu.vector_store %arg5[%c0_50, %c0_51, %c0_52], %78 {strides = array<i32>} : memref<1x1x128xf32, #tpu.memory_space<vmem>>, vector<1x1x128xf32>,
      %cst_53 = arith.constant 0.000000e+00 : f32
      %80 = vector.broadcast %cst_53 : f32 to vector<1x1x128xf32>
      %c0_54 = arith.constant 0 : index
      %c0_55 = arith.constant 0 : index
      %c0_56 = arith.constant 0 : index
      %81 = vector.load %arg6[%c0_54, %c0_55, %c0_56] : memref<1x1x128xf32, #tpu.memory_space<vmem>>, vector<1x1x128xf32>
      tpu.vector_store %arg6[%c0_54, %c0_55, %c0_56], %80 {strides = array<i32>} : memref<1x1x128xf32, #tpu.memory_space<vmem>>, vector<1x1x128xf32>,
    } else {
    }
    %c0_35 = arith.constant 0 : index
    %c0_36 = arith.constant 0 : index
    %c0_37 = arith.constant 0 : index
    %65 = vector.load %arg5[%c0_35, %c0_36, %c0_37] : memref<1x1x128xf32, #tpu.memory_space<vmem>>, vector<1x1x128xf32>
    %cst_38 = arith.constant dense<0.000000e+00> : vector<128xf32>
    %66 = vector.multi_reduction <add>, %59, %cst_38 [0] : vector<256x128xf32> to vector<128xf32>
    %67 = vector.shape_cast %66 : vector<128xf32> to vector<1x128xf32>
    %68 = vector.shape_cast %67 : vector<1x128xf32> to vector<1x1x128xf32>
    %69 = arith.addf %65, %68 : vector<1x1x128xf32>
    %c0_39 = arith.constant 0 : index
    %c0_40 = arith.constant 0 : index
    %c0_41 = arith.constant 0 : index
    %70 = vector.load %arg5[%c0_39, %c0_40, %c0_41] : memref<1x1x128xf32, #tpu.memory_space<vmem>>, vector<1x1x128xf32>
    tpu.vector_store %arg5[%c0_39, %c0_40, %c0_41], %69 {strides = array<i32>} : memref<1x1x128xf32, #tpu.memory_space<vmem>>, vector<1x1x128xf32>,
    %c0_42 = arith.constant 0 : index
    %c0_43 = arith.constant 0 : index
    %c0_44 = arith.constant 0 : index
    %71 = vector.load %arg6[%c0_42, %c0_43, %c0_44] : memref<1x1x128xf32, #tpu.memory_space<vmem>>, vector<1x1x128xf32>
    %72 = arith.mulf %59, %59 : vector<256x128xf32>
    %cst_45 = arith.constant dense<0.000000e+00> : vector<128xf32>
    %73 = vector.multi_reduction <add>, %72, %cst_45 [0] : vector<256x128xf32> to vector<128xf32>
    %74 = vector.shape_cast %73 : vector<128xf32> to vector<1x128xf32>
    %75 = vector.shape_cast %74 : vector<1x128xf32> to vector<1x1x128xf32>
    %76 = arith.addf %71, %75 : vector<1x1x128xf32>
    %c0_46 = arith.constant 0 : index
    %c0_47 = arith.constant 0 : index
    %c0_48 = arith.constant 0 : index
    %77 = vector.load %arg6[%c0_46, %c0_47, %c0_48] : memref<1x1x128xf32, #tpu.memory_space<vmem>>, vector<1x1x128xf32>
    tpu.vector_store %arg6[%c0_46, %c0_47, %c0_48], %76 {strides = array<i32>} : memref<1x1x128xf32, #tpu.memory_space<vmem>>, vector<1x1x128xf32>,
    return
  }
  func.func @transform_0(%arg0: i32, %arg1: i32) -> (i32, i32, i32, i32) {
    %c0_i32 = arith.constant 0 : i32
    %c0_i32_0 = arith.constant 0 : i32
    %c0_i32_1 = arith.constant 0 : i32
    %c0_i32_2 = arith.constant 0 : i32
    return %arg0, %c0_i32, %c0_i32_0, %c0_i32_1 : i32, i32, i32, i32
  }
  func.func @transform_1(%arg0: i32, %arg1: i32) -> (i32, i32, i32) {
    %c0_i32 = arith.constant 0 : i32
    %c0_i32_0 = arith.constant 0 : i32
    %c0_i32_1 = arith.constant 0 : i32
    %c0_i32_2 = arith.constant 0 : i32
    return %c0_i32, %c0_i32_0, %c0_i32_1 : i32, i32, i32
  }
  func.func @transform_2(%arg0: i32, %arg1: i32) -> (i32, i32, i32, i32) {
    %c0_i32 = arith.constant 0 : i32
    %c0_i32_0 = arith.constant 0 : i32
    %c0_i32_1 = arith.constant 0 : i32
    return %arg0, %arg1, %c0_i32, %c0_i32_0 : i32, i32, i32, i32
  }
  func.func @transform_3(%arg0: i32, %arg1: i32) -> (i32, i32, i32) {
    %c0_i32 = arith.constant 0 : i32
    %c0_i32_0 = arith.constant 0 : i32
    %c0_i32_1 = arith.constant 0 : i32
    return %arg0, %c0_i32, %c0_i32_0 : i32, i32, i32
  }
  func.func @transform_4(%arg0: i32, %arg1: i32) -> (i32, i32, i32) {
    %c0_i32 = arith.constant 0 : i32
    %c0_i32_0 = arith.constant 0 : i32
    %c0_i32_1 = arith.constant 0 : i32
    return %arg0, %c0_i32, %c0_i32_0 : i32, i32, i32
  }
}

module attributes {stable_mosaic.version = 11 : i64} {
  func.func @_bn_relu_kernel(%arg0: i32, %arg1: i32, %arg2: memref<1x8x32x128xf32, #tpu.memory_space<vmem>>, %arg3: memref<1x1x1x128xf32, #tpu.memory_space<vmem>>, %arg4: memref<1x1x1x128xf32, #tpu.memory_space<vmem>>, %arg5: memref<1x8x32x128xf32, #tpu.memory_space<vmem>>) attributes {dimension_semantics = [#tpu.dimension_semantics<parallel>, #tpu.dimension_semantics<parallel>], iteration_bounds = array<i64: 2, 4>, scalar_prefetch = 0 : i64, scratch_operands = 0 : i64, tpu.core_type = #tpu.core_type<tc>, window_params = [{transform_indices = @transform_0, window_bounds = array<i64: 1, 8, 32, 128>}, {pipeline_mode = #tpu.pipeline_mode<synchronous>, transform_indices = @transform_1, window_bounds = array<i64: 1, 1, 1, 128>}, {pipeline_mode = #tpu.pipeline_mode<synchronous>, transform_indices = @transform_2, window_bounds = array<i64: 1, 1, 1, 128>}, {transform_indices = @transform_3, window_bounds = array<i64: 1, 8, 32, 128>}]} {
    %c0 = arith.constant 0 : index
    %c0_0 = arith.constant 0 : index
    %c0_1 = arith.constant 0 : index
    %c0_2 = arith.constant 0 : index
    %0 = vector.load %arg2[%c0, %c0_0, %c0_1, %c0_2] : memref<1x8x32x128xf32, #tpu.memory_space<vmem>>, vector<1x8x32x128xf32>
    %c0_3 = arith.constant 0 : index
    %c0_4 = arith.constant 0 : index
    %c0_5 = arith.constant 0 : index
    %c0_6 = arith.constant 0 : index
    %1 = vector.load %arg3[%c0_3, %c0_4, %c0_5, %c0_6] : memref<1x1x1x128xf32, #tpu.memory_space<vmem>>, vector<1x1x1x128xf32>
    %2 = vector.broadcast %1 : vector<1x1x1x128xf32> to vector<1x8x32x128xf32>
    %3 = arith.mulf %0, %2 : vector<1x8x32x128xf32>
    %c0_7 = arith.constant 0 : index
    %c0_8 = arith.constant 0 : index
    %c0_9 = arith.constant 0 : index
    %c0_10 = arith.constant 0 : index
    %4 = vector.load %arg4[%c0_7, %c0_8, %c0_9, %c0_10] : memref<1x1x1x128xf32, #tpu.memory_space<vmem>>, vector<1x1x1x128xf32>
    %5 = vector.broadcast %4 : vector<1x1x1x128xf32> to vector<1x8x32x128xf32>
    %6 = arith.addf %3, %5 : vector<1x8x32x128xf32>
    %cst = arith.constant 0.000000e+00 : f32
    %7 = vector.broadcast %cst : f32 to vector<1x8x32x128xf32>
    %8 = arith.maximumf %6, %7 : vector<1x8x32x128xf32>
    %c0_11 = arith.constant 0 : index
    %c0_12 = arith.constant 0 : index
    %c0_13 = arith.constant 0 : index
    %c0_14 = arith.constant 0 : index
    %9 = vector.load %arg5[%c0_11, %c0_12, %c0_13, %c0_14] : memref<1x8x32x128xf32, #tpu.memory_space<vmem>>, vector<1x8x32x128xf32>
    tpu.vector_store %arg5[%c0_11, %c0_12, %c0_13, %c0_14], %8 {strides = array<i32>} : memref<1x8x32x128xf32, #tpu.memory_space<vmem>>, vector<1x8x32x128xf32>,
    return
  }
  func.func @transform_0(%arg0: i32, %arg1: i32) -> (i32, i32, i32, i32) {
    %c0_i32 = arith.constant 0 : i32
    %c0_i32_0 = arith.constant 0 : i32
    %c0_i32_1 = arith.constant 0 : i32
    return %arg0, %arg1, %c0_i32, %c0_i32_0 : i32, i32, i32, i32
  }
  func.func @transform_1(%arg0: i32, %arg1: i32) -> (i32, i32, i32, i32) {
    %c0_i32 = arith.constant 0 : i32
    %c0_i32_0 = arith.constant 0 : i32
    %c0_i32_1 = arith.constant 0 : i32
    %c0_i32_2 = arith.constant 0 : i32
    %c0_i32_3 = arith.constant 0 : i32
    return %c0_i32, %c0_i32_0, %c0_i32_1, %c0_i32_2 : i32, i32, i32, i32
  }
  func.func @transform_2(%arg0: i32, %arg1: i32) -> (i32, i32, i32, i32) {
    %c0_i32 = arith.constant 0 : i32
    %c0_i32_0 = arith.constant 0 : i32
    %c0_i32_1 = arith.constant 0 : i32
    %c0_i32_2 = arith.constant 0 : i32
    %c0_i32_3 = arith.constant 0 : i32
    return %c0_i32, %c0_i32_0, %c0_i32_1, %c0_i32_2 : i32, i32, i32, i32
  }
  func.func @transform_3(%arg0: i32, %arg1: i32) -> (i32, i32, i32, i32) {
    %c0_i32 = arith.constant 0 : i32
    %c0_i32_0 = arith.constant 0 : i32
    %c0_i32_1 = arith.constant 0 : i32
    return %arg0, %arg1, %c0_i32, %c0_i32_0 : i32, i32, i32, i32
  }
}

</mosaic_0001>

<llo_original>
// kernel: up_block.3
$region0: #{up_block.3}
  #allocation0 [shape = 'u32[]', space=smem, size = 0x4, offset = 0x4, fixed_abs, tag = 'smem constant byte address 0x4 - core index']
  #allocation1 [shape = 'u32[72,128]{1,0:T(1,128)}', space=vmem, size = 0x9000, scoped, tag = 'internal scratch']
  %s0 = inlined_call_operand.vmem [shape: f32[2,32,32,128], index: 0, kind: input, shape index: {}, may-alias: {0,3}]
  %s1 = inlined_call_operand.vmem [shape: f32[1,1,1,128], index: 1, kind: input, shape index: {}]
  %s2 = inlined_call_operand.vmem [shape: f32[1,1,1,128], index: 2, kind: input, shape index: {}]
  %s3 = inlined_call_operand.vmem [shape: f32[2,32,32,128], index: 3, kind: output, shape index: {}, may-alias: {0,3}]
  %s4 = sld [smem:[#allocation0]]
  $region45: #{up_block.3} parent=0
    _
  %s6 = ssub.s32 1, %s4
  %s7 = scalar_select 0, %s6, %s4
  loop: start=0, step=1, limit=10
  $region2: #{up_block.3} parent=0 // loop_pre_header
    _
  $region3: #{up_block.3} parent=0 // loop_header
    %s9 = sphi 0, %s13
    %p10 = scmp.ge.s32.totalorder %s9, 10
    %s16 = sphi 0, %s28
    %s17 = sphi 0, %s24
    %s18 = sphi 0, %s16
    %s19 = sphi 0, %s17
    %s20 = sphi 0, %s18
    %s21 = sphi 0, %s19
    %s33 = sphi 0, %s35
    %s36 = sphi 0, %s33
    %s37 = sphi 0, %s36
    %s53 = sphi 0, %s37
    %s57 = sphi 0, %s57
    %s59 = sphi 0, %s57
    %s60 = sphi 0, %s59
    %s74 = sphi 0, %s60
    %s78 = sphi 0, %s78
    %s80 = sphi 0, %s78
    %s81 = sphi 0, %s80
    %s95 = sphi 0, %s81
    %s103 = sphi 0, %s105
    %s106 = sphi 0, %s103
    %s107 = sphi 0, %s106
    %s123 = sphi 0, %s107
  $region4: #{up_block.3} parent=0 // loop_header_branch
    %12 = sbr.rel (%p10) target = $region8
  $region5: #{up_block.3} parent=0 // loop_body
    %s14 = ssub.s32 %s9, 1
    %s15 = ssub.s32 %s9, 2
    %s22 = sadd.s32 1, %s17
    %p23 = scmp.ge.s32.totalorder %s22, 4
    %s24 = scalar_select %p23, 0, %s22
    %s25 = sadd.s32 1, %s16
    %s26 = scalar_select %p23, %s25, %s16
    %p27 = scmp.ge.s32.totalorder %s26, 2
    %s28 = scalar_select %p27, 0, %s26
    %s29 = ssub.s32 %s16, %s28
    %s30 = ssub.s32 %s17, %s24
    %s31 = sor.u32 %s29, %s30
    %p32 = scmp.eq.s32.totalorder %s31, 0
    %s34 = sadd.s32 %s33, 1
    %s35 = scalar_select %p32, %s33, %s34
    %p38 = pneg %p32
    %p39 = scmp.eq.s32.totalorder %s9, 7
    %p40 = por %p38, %p39
    %p41 = scmp.ne.s32.totalorder %s33, %s36
    %p42 = scmp.eq.s32.totalorder %s9, 0
    %p43 = por %p41, %p42
    %p44 = scmp.ne.s32.totalorder %s33, %s36
    %p45 = scmp.eq.s32.totalorder %s14, 7
    %p46 = por %p44, %p45
    %p47 = scmp.ne.s32.totalorder %s36, %s37
    %p48 = scmp.eq.s32.totalorder %s14, 0
    %p49 = por %p47, %p48
    %p50 = scmp.ne.s32.totalorder %s36, %s37
    %p51 = scmp.eq.s32.totalorder %s15, 7
    %p52 = por %p50, %p51
    %p54 = scmp.ne.s32.totalorder %s37, %s53
    %p55 = scmp.eq.s32.totalorder %s15, 0
    %p56 = por %p54, %p55
    %s58 = sadd.s32 %s57, 1
    %p61 = scmp.eq.s32.totalorder %s9, 7
    %p62 = scmp.ne.s32.totalorder %s57, %s59
    %p63 = scmp.eq.s32.totalorder %s9, 0
    %p64 = por %p62, %p63
    %p65 = scmp.ne.s32.totalorder %s57, %s59
    %p66 = scmp.eq.s32.totalorder %s14, 7
    %p67 = por %p65, %p66
    %p68 = scmp.ne.s32.totalorder %s59, %s60
    %p69 = scmp.eq.s32.totalorder %s14, 0
    %p70 = por %p68, %p69
    %p71 = scmp.ne.s32.totalorder %s59, %s60
    %p72 = scmp.eq.s32.totalorder %s15, 7
    %p73 = por %p71, %p72
    %p75 = scmp.ne.s32.totalorder %s60, %s74
    %p76 = scmp.eq.s32.totalorder %s15, 0
    %p77 = por %p75, %p76
    %s79 = sadd.s32 %s78, 1
    %p82 = scmp.eq.s32.totalorder %s9, 7
    %p83 = scmp.ne.s32.totalorder %s78, %s80
    %p84 = scmp.eq.s32.totalorder %s9, 0
    %p85 = por %p83, %p84
    %p86 = scmp.ne.s32.totalorder %s78, %s80
    %p87 = scmp.eq.s32.totalorder %s14, 7
    %p88 = por %p86, %p87
    %p89 = scmp.ne.s32.totalorder %s80, %s81
    %p90 = scmp.eq.s32.totalorder %s14, 0
    %p91 = por %p89, %p90
    %p92 = scmp.ne.s32.totalorder %s80, %s81
    %p93 = scmp.eq.s32.totalorder %s15, 7
    %p94 = por %p92, %p93
    %p96 = scmp.ne.s32.totalorder %s81, %s95
    %p97 = scmp.eq.s32.totalorder %s15, 0
    %p98 = por %p96, %p97
    %s99 = ssub.s32 %s16, %s28
    %s100 = ssub.s32 %s17, %s24
    %s101 = sor.u32 %s99, %s100
    %p102 = scmp.eq.s32.totalorder %s101, 0
    %s104 = sadd.s32 %s103, 1
    %s105 = scalar_select %p102, %s103, %s104
    %p108 = pneg %p102
    %p109 = scmp.eq.s32.totalorder %s9, 7
    %p110 = por %p108, %p109
    %p111 = scmp.ne.s32.totalorder %s103, %s106
    %p112 = scmp.eq.s32.totalorder %s9, 0
    %p113 = por %p111, %p112
    %p114 = scmp.ne.s32.totalorder %s103, %s106
    %p115 = scmp.eq.s32.totalorder %s14, 7
    %p116 = por %p114, %p115
    %p117 = scmp.ne.s32.totalorder %s106, %s107
    %p118 = scmp.eq.s32.totalorder %s14, 0
    %p119 = por %p117, %p118
    %p120 = scmp.ne.s32.totalorder %s106, %s107
    %p121 = scmp.eq.s32.totalorder %s15, 7
    %p122 = por %p120, %p121
    %p124 = scmp.ne.s32.totalorder %s107, %s123
    %p125 = scmp.eq.s32.totalorder %s15, 0
    %p126 = por %p124, %p125
    %p127 = scmp.le.s32.totalorder 1, %s9
    %p128 = scmp.lt.s32.totalorder %s9, 9
    %p129 = pnand %p127, %p128
    %p130 = pneg %p129
    // Predicated region
    $region9: #{up_block.3} parent=5 // pred_check
      _
    $region10: #{up_block.3} parent=5 // pred_check_branch
      %132 = sbr.rel (%p129) target = $region12
    $region11: #{up_block.3} parent=5 // pred_region
      %s133 = ssub.s32 %s9, 1
      // Predicated region
      $region13: #{up_block.3} parent=11 // pred_check
        %p134 = pneg %p70
      $region14: #{up_block.3} parent=11 // pred_check_branch
        %136 = sbr.rel (%p134) target = $region16
      $region15: #{up_block.3} parent=11 // pred_region
        _
      $region16: #{up_block.3} parent=11 // pred_fallthru
        _
      // Predicated region
      $region17: #{up_block.3} parent=11 // pred_check
        %p137 = pneg %p91
      $region18: #{up_block.3} parent=11 // pred_check_branch
        %139 = sbr.rel (%p137) target = $region20
      $region19: #{up_block.3} parent=11 // pred_region
        _
      $region20: #{up_block.3} parent=11 // pred_fallthru
        _
    $region12: #{up_block.3} parent=5 // pred_fallthru
      _
    %p140 = scmp.lt.s32.totalorder %s9, 8
    // Predicated region
    $region21: #{up_block.3} parent=5 // pred_check
      %p141 = pneg %p140
    $region22: #{up_block.3} parent=5 // pred_check_branch
      %143 = sbr.rel (%p141) target = $region24
    $region23: #{up_block.3} parent=5 // pred_region
      // Predicated region
      $region25: #{up_block.3} parent=23 // pred_check
        %p144 = pneg %p43
      $region26: #{up_block.3} parent=23 // pred_check_branch
        %146 = sbr.rel (%p144) target = $region28
      $region27: #{up_block.3} parent=23 // pred_region
        %s147 = smul.u32 8, %s17
        %p148 = scmp.lt.s32.totalorder %s16, 1
        %s149 = scalar_select %p148, %s16, 1
        %p150 = scmp.lt.s32.totalorder %s147, 31
        %s151 = scalar_select %p150, %s147, 31
        %s152 = smul.addr %s151, 4
        %s153 = smul.addr %s149, 128
        %s154 = sadd.s32 %s152, %s153
        %s155 = smul.addr %s154, 8
        %s156 = scalar_lea.vmem %s0, %s155
        %s157 = smul.u32 8, %s17
      $region28: #{up_block.3} parent=23 // pred_fallthru
        _
    $region24: #{up_block.3} parent=5 // pred_fallthru
      _
    %p158 = scmp.le.s32.totalorder 1, %s9
    %p159 = scmp.lt.s32.totalorder %s9, 9
    %p160 = pnand %p158, %p159
    %p161 = pneg %p160
    // Predicated region
    $region29: #{up_block.3} parent=5 // pred_check
      _
    $region30: #{up_block.3} parent=5 // pred_check_branch
      %163 = sbr.rel (%p160) target = $region32
    $region31: #{up_block.3} parent=5 // pred_region
      %s164 = ssub.s32 %s9, 1
      %s165 = smul.u32 8, %s19
      %p166 = scmp.lt.s32.totalorder %s18, 1
      %s167 = scalar_select %p166, %s18, 1
      %p168 = scmp.lt.s32.totalorder %s165, 31
      %s169 = scalar_select %p168, %s165, 31
      %s170 = smul.addr %s169, 4
      %s171 = smul.addr %s167, 128
      %s172 = sadd.s32 %s170, %s171
      %s173 = smul.addr %s172, 8
      %s174 = scalar_lea.vmem %s0, %s173
      %p175 = pneg %p49
      %p176 = pneg %p46
      %p177 = pneg %p70
      %p178 = pneg %p67
      %p179 = pneg %p91
      %p180 = pneg %p88
      %p181 = pneg %p119
      %p182 = pneg %p116
      %s183 = smul.u32 8, %s19
      %p184 = scmp.lt.s32.totalorder %s18, 1
      %s185 = scalar_select %p184, %s18, 1
      %p186 = scmp.lt.s32.totalorder %s183, 31
      %s187 = scalar_select %p186, %s183, 31
      %s188 = smul.addr %s187, 4
      %s189 = smul.addr %s185, 128
      %s190 = sadd.s32 %s188, %s189
      %s191 = smul.addr %s190, 8
      %s192 = scalar_lea.vmem %s3, %s191
      %s193 = smul.u32 8, %s19
      %p194 = scmp.lt.s32.totalorder %s18, 1
      %s195 = scalar_select %p194, %s18, 1
      %p196 = scmp.lt.s32.totalorder %s193, 31
      %s197 = scalar_select %p196, %s193, 31
      %s198 = smul.addr %s197, 4
      %s199 = smul.addr %s195, 128
      %s200 = sadd.s32 %s198, %s199
      %s201 = smul.addr %s200, 8
      %s202 = scalar_lea.vmem %s0, %s201
      %s203 = smul.u32 8, %s19
      %s204 = smul.u32 8, %s19
      %p205 = scmp.lt.s32.totalorder %s18, 1
      %s206 = scalar_select %p205, %s18, 1
      %p207 = scmp.lt.s32.totalorder %s204, 31
      %s208 = scalar_select %p207, %s204, 31
      %s209 = smul.addr %s208, 4
      %s210 = smul.addr %s206, 128
      %s211 = sadd.s32 %s209, %s210
      %s212 = smul.addr %s211, 8
      %s213 = scalar_lea.vmem %s3, %s212
      %s214 = smul.u32 8, %s19
      %v215 = vld [vmem:[%s202] sm:$0xff]
      %v216 = vld [vmem:[%s202 + $0x8] sm:$0xff]
      %v217 = vld [vmem:[%s202 + $0x10] sm:$0xff]
      %v218 = vld [vmem:[%s202 + $0x18] sm:$0xff]
      %v219 = vld [vmem:[%s202 + $0x20] sm:$0xff]
      %v220 = vld [vmem:[%s202 + $0x28] sm:$0xff]
      %v221 = vld [vmem:[%s202 + $0x30] sm:$0xff]
      %v222 = vld [vmem:[%s202 + $0x38] sm:$0xff]
      %v223 = vld [vmem:[%s202 + $0x40] sm:$0xff]
      %v224 = vld [vmem:[%s202 + $0x48] sm:$0xff]
      %v225 = vld [vmem:[%s202 + $0x50] sm:$0xff]
      %v226 = vld [vmem:[%s202 + $0x58] sm:$0xff]
      %v227 = vld [vmem:[%s202 + $0x60] sm:$0xff]
      %v228 = vld [vmem:[%s202 + $0x68] sm:$0xff]
      %v229 = vld [vmem:[%s202 + $0x70] sm:$0xff]
      %v230 = vld [vmem:[%s202 + $0x78] sm:$0xff]
      %v231 = vld [vmem:[%s202 + $0x80] sm:$0xff]
      %v232 = vld [vmem:[%s202 + $0x88] sm:$0xff]
      %v233 = vld [vmem:[%s202 + $0x90] sm:$0xff]
      %v234 = vld [vmem:[%s202 + $0x98] sm:$0xff]
      %v235 = vld [vmem:[%s202 + $0xa0] sm:$0xff]
      %v236 = vld [vmem:[%s202 + $0xa8] sm:$0xff]
      %v237 = vld [vmem:[%s202 + $0xb0] sm:$0xff]
      %v238 = vld [vmem:[%s202 + $0xb8] sm:$0xff]
      %v239 = vld [vmem:[%s202 + $0xc0] sm:$0xff]
      %v240 = vld [vmem:[%s202 + $0xc8] sm:$0xff]
      %v241 = vld [vmem:[%s202 + $0xd0] sm:$0xff]
      %v242 = vld [vmem:[%s202 + $0xd8] sm:$0xff]
      %v243 = vld [vmem:[%s202 + $0xe0] sm:$0xff]
      %v244 = vld [vmem:[%s202 + $0xe8] sm:$0xff]
      %v245 = vld [vmem:[%s202 + $0xf0] sm:$0xff]
      %v246 = vld [vmem:[%s202 + $0xf8] sm:$0xff]
      %v247 = vld [vmem:[%s1] sm:$0x1]
      %v249 = vperm.slane %v247, 0
      %v251 = vmul.f32 %v215, %v249
      %v252 = vmul.f32 %v216, %v249
      %v253 = vmul.f32 %v217, %v249
      %v254 = vmul.f32 %v218, %v249
      %v255 = vmul.f32 %v219, %v249
      %v256 = vmul.f32 %v220, %v249
      %v257 = vmul.f32 %v221, %v249
      %v258 = vmul.f32 %v222, %v249
      %v259 = vmul.f32 %v223, %v249
      %v260 = vmul.f32 %v224, %v249
      %v261 = vmul.f32 %v225, %v249
      %v262 = vmul.f32 %v226, %v249
      %v263 = vmul.f32 %v227, %v249
      %v264 = vmul.f32 %v228, %v249
      %v265 = vmul.f32 %v229, %v249
      %v266 = vmul.f32 %v230, %v249
      %v267 = vmul.f32 %v231, %v249
      %v268 = vmul.f32 %v232, %v249
      %v269 = vmul.f32 %v233, %v249
      %v270 = vmul.f32 %v234, %v249
      %v271 = vmul.f32 %v235, %v249
      %v272 = vmul.f32 %v236, %v249
      %v273 = vmul.f32 %v237, %v249
      %v274 = vmul.f32 %v238, %v249
      %v275 = vmul.f32 %v239, %v249
      %v276 = vmul.f32 %v240, %v249
      %v277 = vmul.f32 %v241, %v249
      %v278 = vmul.f32 %v242, %v249
      %v279 = vmul.f32 %v243, %v249
      %v280 = vmul.f32 %v244, %v249
      %v281 = vmul.f32 %v245, %v249
      %v282 = vmul.f32 %v246, %v249
      %v283 = vld [vmem:[%s2] sm:$0x1]
      %v285 = vperm.slane %v283, 0
      %v287 = vadd.f32 %v251, %v285
      %v288 = vadd.f32 %v252, %v285
      %v289 = vadd.f32 %v253, %v285
      %v290 = vadd.f32 %v254, %v285
      %v291 = vadd.f32 %v255, %v285
      %v292 = vadd.f32 %v256, %v285
      %v293 = vadd.f32 %v257, %v285
      %v294 = vadd.f32 %v258, %v285
      %v295 = vadd.f32 %v259, %v285
      %v296 = vadd.f32 %v260, %v285
      %v297 = vadd.f32 %v261, %v285
      %v298 = vadd.f32 %v262, %v285
      %v299 = vadd.f32 %v263, %v285
      %v300 = vadd.f32 %v264, %v285
      %v301 = vadd.f32 %v265, %v285
      %v302 = vadd.f32 %v266, %v285
      %v303 = vadd.f32 %v267, %v285
      %v304 = vadd.f32 %v268, %v285
      %v305 = vadd.f32 %v269, %v285
      %v306 = vadd.f32 %v270, %v285
      %v307 = vadd.f32 %v271, %v285
      %v308 = vadd.f32 %v272, %v285
      %v309 = vadd.f32 %v273, %v285
      %v310 = vadd.f32 %v274, %v285
      %v311 = vadd.f32 %v275, %v285
      %v312 = vadd.f32 %v276, %v285
      %v313 = vadd.f32 %v277, %v285
      %v314 = vadd.f32 %v278, %v285
      %v315 = vadd.f32 %v279, %v285
      %v316 = vadd.f32 %v280, %v285
      %v317 = vadd.f32 %v281, %v285
      %v318 = vadd.f32 %v282, %v285
      %v319 = vmax.f32 %v287, 0.0
      %v320 = vmax.f32 %v288, 0.0
      %v321 = vmax.f32 %v289, 0.0
      %v322 = vmax.f32 %v290, 0.0
      %v323 = vmax.f32 %v291, 0.0
      %v324 = vmax.f32 %v292, 0.0
      %v325 = vmax.f32 %v293, 0.0
      %v326 = vmax.f32 %v294, 0.0
      %v327 = vmax.f32 %v295, 0.0
      %v328 = vmax.f32 %v296, 0.0
      %v329 = vmax.f32 %v297, 0.0
      %v330 = vmax.f32 %v298, 0.0
      %v331 = vmax.f32 %v299, 0.0
      %v332 = vmax.f32 %v300, 0.0
      %v333 = vmax.f32 %v301, 0.0
      %v334 = vmax.f32 %v302, 0.0
      %v335 = vmax.f32 %v303, 0.0
      %v336 = vmax.f32 %v304, 0.0
      %v337 = vmax.f32 %v305, 0.0
      %v338 = vmax.f32 %v306, 0.0
      %v339 = vmax.f32 %v307, 0.0
      %v340 = vmax.f32 %v308, 0.0
      %v341 = vmax.f32 %v309, 0.0
      %v342 = vmax.f32 %v310, 0.0
      %v343 = vmax.f32 %v311, 0.0
      %v344 = vmax.f32 %v312, 0.0
      %v345 = vmax.f32 %v313, 0.0
      %v346 = vmax.f32 %v314, 0.0
      %v347 = vmax.f32 %v315, 0.0
      %v348 = vmax.f32 %v316, 0.0
      %v349 = vmax.f32 %v317, 0.0
      %v350 = vmax.f32 %v318, 0.0
      %351 = vst [vmem:[%s213] sm:$0xff] %v319
      %352 = vst [vmem:[%s213 + $0x8] sm:$0xff] %v320
      %353 = vst [vmem:[%s213 + $0x10] sm:$0xff] %v321
      %354 = vst [vmem:[%s213 + $0x18] sm:$0xff] %v322
      %355 = vst [vmem:[%s213 + $0x20] sm:$0xff] %v323
      %356 = vst [vmem:[%s213 + $0x28] sm:$0xff] %v324
      %357 = vst [vmem:[%s213 + $0x30] sm:$0xff] %v325
      %358 = vst [vmem:[%s213 + $0x38] sm:$0xff] %v326
      %359 = vst [vmem:[%s213 + $0x40] sm:$0xff] %v327
      %360 = vst [vmem:[%s213 + $0x48] sm:$0xff] %v328
      %361 = vst [vmem:[%s213 + $0x50] sm:$0xff] %v329
      %362 = vst [vmem:[%s213 + $0x58] sm:$0xff] %v330
      %363 = vst [vmem:[%s213 + $0x60] sm:$0xff] %v331
      %364 = vst [vmem:[%s213 + $0x68] sm:$0xff] %v332
      %365 = vst [vmem:[%s213 + $0x70] sm:$0xff] %v333
      %366 = vst [vmem:[%s213 + $0x78] sm:$0xff] %v334
      %367 = vst [vmem:[%s213 + $0x80] sm:$0xff] %v335
      %368 = vst [vmem:[%s213 + $0x88] sm:$0xff] %v336
      %369 = vst [vmem:[%s213 + $0x90] sm:$0xff] %v337
      %370 = vst [vmem:[%s213 + $0x98] sm:$0xff] %v338
      %371 = vst [vmem:[%s213 + $0xa0] sm:$0xff] %v339
      %372 = vst [vmem:[%s213 + $0xa8] sm:$0xff] %v340
      %373 = vst [vmem:[%s213 + $0xb0] sm:$0xff] %v341
      %374 = vst [vmem:[%s213 + $0xb8] sm:$0xff] %v342
      %375 = vst [vmem:[%s213 + $0xc0] sm:$0xff] %v343
      %376 = vst [vmem:[%s213 + $0xc8] sm:$0xff] %v344
      %377 = vst [vmem:[%s213 + $0xd0] sm:$0xff] %v345
      %378 = vst [vmem:[%s213 + $0xd8] sm:$0xff] %v346
      %379 = vst [vmem:[%s213 + $0xe0] sm:$0xff] %v347
      %380 = vst [vmem:[%s213 + $0xe8] sm:$0xff] %v348
      %381 = vst [vmem:[%s213 + $0xf0] sm:$0xff] %v349
      %382 = vst [vmem:[%s213 + $0xf8] sm:$0xff] %v350
      %s383 = smul.u32 8, %s19
      %p384 = scmp.lt.s32.totalorder %s18, 1
      %s385 = scalar_select %p384, %s18, 1
      %p386 = scmp.lt.s32.totalorder %s383, 31
      %s387 = scalar_select %p386, %s383, 31
      %s388 = smul.addr %s387, 4
      %s389 = smul.addr %s385, 128
      %s390 = sadd.s32 %s388, %s389
      %s391 = smul.addr %s390, 8
      %s392 = scalar_lea.vmem %s3, %s391
      // Predicated region
      $region33: #{up_block.3} parent=31 // pred_check
        %p393 = pneg %p116
      $region34: #{up_block.3} parent=31 // pred_check_branch
        %395 = sbr.rel (%p393) target = $region36
      $region35: #{up_block.3} parent=31 // pred_region
        %s396 = smul.u32 8, %s19
      $region36: #{up_block.3} parent=31 // pred_fallthru
        _
    $region32: #{up_block.3} parent=5 // pred_fallthru
      _
    %p397 = scmp.le.s32.totalorder 2, %s9
    // Predicated region
    $region37: #{up_block.3} parent=5 // pred_check
      %p398 = pneg %p397
    $region38: #{up_block.3} parent=5 // pred_check_branch
      %400 = sbr.rel (%p398) target = $region40
    $region39: #{up_block.3} parent=5 // pred_region
      %s401 = ssub.s32 %s9, 2
      // Predicated region
      $region41: #{up_block.3} parent=39 // pred_check
        %p402 = pneg %p122
      $region42: #{up_block.3} parent=39 // pred_check_branch
        %404 = sbr.rel (%p402) target = $region44
      $region43: #{up_block.3} parent=39 // pred_region
        %s405 = smul.u32 8, %s21
        %p406 = scmp.lt.s32.totalorder %s20, 1
        %s407 = scalar_select %p406, %s20, 1
        %p408 = scmp.lt.s32.totalorder %s405, 31
        %s409 = scalar_select %p408, %s405, 31
        %s410 = smul.addr %s409, 4
        %s411 = smul.addr %s407, 128
        %s412 = sadd.s32 %s410, %s411
        %s413 = smul.addr %s412, 8
        %s414 = scalar_lea.vmem %s3, %s413
      $region44: #{up_block.3} parent=39 // pred_fallthru
        _
    $region40: #{up_block.3} parent=5 // pred_fallthru
      _
  $region6: #{up_block.3} parent=0 // loop_footer
    %s13 = sadd.s32 1, %s9
  $region7: #{up_block.3} parent=0 // loop_footer_branch
    %8 = sbr.rel target = $region3
  $region8: #{up_block.3} parent=0 // loop_exit
    _

// kernel: up_block.2
$region0: #{up_block.2}
  #allocation0 [shape = 'u32[]', space=smem, size = 0x4, offset = 0x4, fixed_abs, tag = 'smem constant byte address 0x4 - core index']
  #allocation1 [shape = 'u32[72,128]{1,0:T(1,128)}', space=vmem, size = 0x9000, scoped, tag = 'internal scratch']
  %s0 = inlined_call_operand.vmem [shape: f32[2,34,34,4], index: 0, kind: input, shape index: {}]
  %s1 = inlined_call_operand.vmem [shape: f32[9,4,128], index: 1, kind: input, shape index: {}]
  %s2 = inlined_call_operand.vmem [shape: f32[2,32,32,128], index: 2, kind: output, shape index: {0}]
  %s3 = inlined_call_operand.vmem [shape: f32[2,1,128], index: 3, kind: output, shape index: {1}]
  %s4 = inlined_call_operand.vmem [shape: f32[2,1,128], index: 4, kind: output, shape index: {2}]
  %5 = xla_tuple %s2, %s3, %s4
  %s6 = sld [smem:[#allocation0]]
  $region61: #{up_block.2} parent=0
    _
  %s8 = ssub.s32 1, %s6
  %s9 = scalar_select 0, %s8, %s6
  loop: start=0, step=1, limit=10
  $region2: #{up_block.2} parent=0 // loop_pre_header
    _
  $region3: #{up_block.2} parent=0 // loop_header
    %s11 = sphi 0, %s15
    %p12 = scmp.ge.s32.totalorder %s11, 10
    %s18 = sphi 0, %s30
    %s19 = sphi 0, %s26
    %s20 = sphi 0, %s18
    %s21 = sphi 0, %s19
    %s22 = sphi 0, %s20
    %s23 = sphi 0, %s21
    %s33 = sphi 0, %s35
    %s36 = sphi 0, %s33
    %s37 = sphi 0, %s36
    %s53 = sphi 0, %s37
    %s57 = sphi 0, %s57
    %s59 = sphi 0, %s57
    %s60 = sphi 0, %s59
    %s74 = sphi 0, %s60
    %s82 = sphi 0, %s84
    %s85 = sphi 0, %s82
    %s86 = sphi 0, %s85
    %s102 = sphi 0, %s86
    %s108 = sphi 0, %s110
    %s111 = sphi 0, %s108
    %s112 = sphi 0, %s111
    %s128 = sphi 0, %s112
    %s134 = sphi 0, %s136
    %s137 = sphi 0, %s134
    %s138 = sphi 0, %s137
    %s154 = sphi 0, %s138
  $region4: #{up_block.2} parent=0 // loop_header_branch
    %14 = sbr.rel (%p12) target = $region8
  $region5: #{up_block.2} parent=0 // loop_body
    %s16 = ssub.s32 %s11, 1
    %s17 = ssub.s32 %s11, 2
    %s24 = sadd.s32 1, %s19
    %p25 = scmp.ge.s32.totalorder %s24, 4
    %s26 = scalar_select %p25, 0, %s24
    %s27 = sadd.s32 1, %s18
    %s28 = scalar_select %p25, %s27, %s18
    %p29 = scmp.ge.s32.totalorder %s28, 2
    %s30 = scalar_select %p29, 0, %s28
    %s31 = ssub.s32 %s18, %s30
    %p32 = scmp.eq.s32.totalorder %s31, 0
    %s34 = sadd.s32 %s33, 1
    %s35 = scalar_select %p32, %s33, %s34
    %p38 = pneg %p32
    %p39 = scmp.eq.s32.totalorder %s11, 7
    %p40 = por %p38, %p39
    %p41 = scmp.ne.s32.totalorder %s33, %s36
    %p42 = scmp.eq.s32.totalorder %s11, 0
    %p43 = por %p41, %p42
    %p44 = scmp.ne.s32.totalorder %s33, %s36
    %p45 = scmp.eq.s32.totalorder %s16, 7
    %p46 = por %p44, %p45
    %p47 = scmp.ne.s32.totalorder %s36, %s37
    %p48 = scmp.eq.s32.totalorder %s16, 0
    %p49 = por %p47, %p48
    %p50 = scmp.ne.s32.totalorder %s36, %s37
    %p51 = scmp.eq.s32.totalorder %s17, 7
    %p52 = por %p50, %p51
    %p54 = scmp.ne.s32.totalorder %s37, %s53
    %p55 = scmp.eq.s32.totalorder %s17, 0
    %p56 = por %p54, %p55
    %s58 = sadd.s32 %s57, 1
    %p61 = scmp.eq.s32.totalorder %s11, 7
    %p62 = scmp.ne.s32.totalorder %s57, %s59
    %p63 = scmp.eq.s32.totalorder %s11, 0
    %p64 = por %p62, %p63
    %p65 = scmp.ne.s32.totalorder %s57, %s59
    %p66 = scmp.eq.s32.totalorder %s16, 7
    %p67 = por %p65, %p66
    %p68 = scmp.ne.s32.totalorder %s59, %s60
    %p69 = scmp.eq.s32.totalorder %s16, 0
    %p70 = por %p68, %p69
    %p71 = scmp.ne.s32.totalorder %s59, %s60
    %p72 = scmp.eq.s32.totalorder %s17, 7
    %p73 = por %p71, %p72
    %p75 = scmp.ne.s32.totalorder %s60, %s74
    %p76 = scmp.eq.s32.totalorder %s17, 0
    %p77 = por %p75, %p76
    %s78 = ssub.s32 %s18, %s30
    %s79 = ssub.s32 %s19, %s26
    %s80 = sor.u32 %s78, %s79
    %p81 = scmp.eq.s32.totalorder %s80, 0
    %s83 = sadd.s32 %s82, 1
    %s84 = scalar_select %p81, %s82, %s83
    %p87 = pneg %p81
    %p88 = scmp.eq.s32.totalorder %s11, 7
    %p89 = por %p87, %p88
    %p90 = scmp.ne.s32.totalorder %s82, %s85
    %p91 = scmp.eq.s32.totalorder %s11, 0
    %p92 = por %p90, %p91
    %p93 = scmp.ne.s32.totalorder %s82, %s85
    %p94 = scmp.eq.s32.totalorder %s16, 7
    %p95 = por %p93, %p94
    %p96 = scmp.ne.s32.totalorder %s85, %s86
    %p97 = scmp.eq.s32.totalorder %s16, 0
    %p98 = por %p96, %p97
    %p99 = scmp.ne.s32.totalorder %s85, %s86
    %p100 = scmp.eq.s32.totalorder %s17, 7
    %p101 = por %p99, %p100
    %p103 = scmp.ne.s32.totalorder %s86, %s102
    %p104 = scmp.eq.s32.totalorder %s17, 0
    %p105 = por %p103, %p104
    %s106 = ssub.s32 %s18, %s30
    %p107 = scmp.eq.s32.totalorder %s106, 0
    %s109 = sadd.s32 %s108, 1
    %s110 = scalar_select %p107, %s108, %s109
    %p113 = pneg %p107
    %p114 = scmp.eq.s32.totalorder %s11, 7
    %p115 = por %p113, %p114
    %p116 = scmp.ne.s32.totalorder %s108, %s111
    %p117 = scmp.eq.s32.totalorder %s11, 0
    %p118 = por %p116, %p117
    %p119 = scmp.ne.s32.totalorder %s108, %s111
    %p120 = scmp.eq.s32.totalorder %s16, 7
    %p121 = por %p119, %p120
    %p122 = scmp.ne.s32.totalorder %s111, %s112
    %p123 = scmp.eq.s32.totalorder %s16, 0
    %p124 = por %p122, %p123
    %p125 = scmp.ne.s32.totalorder %s111, %s112
    %p126 = scmp.eq.s32.totalorder %s17, 7
    %p127 = por %p125, %p126
    %p129 = scmp.ne.s32.totalorder %s112, %s128
    %p130 = scmp.eq.s32.totalorder %s17, 0
    %p131 = por %p129, %p130
    %s132 = ssub.s32 %s18, %s30
    %p133 = scmp.eq.s32.totalorder %s132, 0
    %s135 = sadd.s32 %s134, 1
    %s136 = scalar_select %p133, %s134, %s135
    %p139 = pneg %p133
    %p140 = scmp.eq.s32.totalorder %s11, 7
    %p141 = por %p139, %p140
    %p142 = scmp.ne.s32.totalorder %s134, %s137
    %p143 = scmp.eq.s32.totalorder %s11, 0
    %p144 = por %p142, %p143
    %p145 = scmp.ne.s32.totalorder %s134, %s137
    %p146 = scmp.eq.s32.totalorder %s16, 7
    %p147 = por %p145, %p146
    %p148 = scmp.ne.s32.totalorder %s137, %s138
    %p149 = scmp.eq.s32.totalorder %s16, 0
    %p150 = por %p148, %p149
    %p151 = scmp.ne.s32.totalorder %s137, %s138
    %p152 = scmp.eq.s32.totalorder %s17, 7
    %p153 = por %p151, %p152
    %p155 = scmp.ne.s32.totalorder %s138, %s154
    %p156 = scmp.eq.s32.totalorder %s17, 0
    %p157 = por %p155, %p156
    %p158 = scmp.le.s32.totalorder 1, %s11
    %p159 = scmp.lt.s32.totalorder %s11, 9
    %p160 = pnand %p158, %p159
    %p161 = pneg %p160
    // Predicated region
    $region9: #{up_block.2} parent=5 // pred_check
      _
    $region10: #{up_block.2} parent=5 // pred_check_branch
      %163 = sbr.rel (%p160) target = $region12
    $region11: #{up_block.2} parent=5 // pred_region
      %s164 = ssub.s32 %s11, 1
      // Predicated region
      $region13: #{up_block.2} parent=11 // pred_check
        %p165 = pneg %p70
      $region14: #{up_block.2} parent=11 // pred_check_branch
        %167 = sbr.rel (%p165) target = $region16
      $region15: #{up_block.2} parent=11 // pred_region
        _
      $region16: #{up_block.2} parent=11 // pred_fallthru
        _
    $region12: #{up_block.2} parent=5 // pred_fallthru
      _
    %p168 = scmp.lt.s32.totalorder %s11, 8
    // Predicated region
    $region17: #{up_block.2} parent=5 // pred_check
      %p169 = pneg %p168
    $region18: #{up_block.2} parent=5 // pred_check_branch
      %171 = sbr.rel (%p169) target = $region20
    $region19: #{up_block.2} parent=5 // pred_region
      // Predicated region
      $region21: #{up_block.2} parent=19 // pred_check
        %p172 = pneg %p43
      $region22: #{up_block.2} parent=19 // pred_check_branch
        %174 = sbr.rel (%p172) target = $region24
      $region23: #{up_block.2} parent=19 // pred_region
        %p175 = scmp.lt.s32.totalorder %s18, 1
        %s176 = scalar_select %p175, %s18, 1
        %s177 = smul.addr %s176, 170
        %s178 = smul.addr %s177, 8
        %s179 = scalar_lea.vmem %s0, %s178
      $region24: #{up_block.2} parent=19 // pred_fallthru
        _
    $region20: #{up_block.2} parent=5 // pred_fallthru
      _
    %p180 = scmp.le.s32.totalorder 1, %s11
    %p181 = scmp.lt.s32.totalorder %s11, 9
    %p182 = pnand %p180, %p181
    %p183 = pneg %p182
    // Predicated region
    $region25: #{up_block.2} parent=5 // pred_check
      _
    $region26: #{up_block.2} parent=5 // pred_check_branch
      %185 = sbr.rel (%p182) target = $region28
    $region27: #{up_block.2} parent=5 // pred_region
      %s186 = ssub.s32 %s11, 1
      %p187 = scmp.lt.s32.totalorder %s20, 1
      %s188 = scalar_select %p187, %s20, 1
      %s189 = smul.addr %s188, 170
      %s190 = smul.addr %s189, 8
      %s191 = scalar_lea.vmem %s0, %s190
      %p192 = pneg %p49
      %p193 = pneg %p46
      %p194 = pneg %p70
      %p195 = pneg %p67
      %p196 = pneg %p98
      %p197 = pneg %p95
      %s198 = smul.u32 8, %s21
      %p199 = scmp.lt.s32.totalorder %s20, 1
      %s200 = scalar_select %p199, %s20, 1
      %p201 = scmp.lt.s32.totalorder %s198, 31
      %s202 = scalar_select %p201, %s198, 31
      %s203 = smul.addr %s202, 4
      %s204 = smul.addr %s200, 128
      %s205 = sadd.s32 %s203, %s204
      %s206 = smul.addr %s205, 8
      %s207 = scalar_lea.vmem %s2, %s206
      %p208 = pneg %p124
      %p209 = pneg %p121
      %p210 = scmp.lt.s32.totalorder %s20, 1
      %s211 = scalar_select %p210, %s20, 1
      %s212 = scalar_lea.vmem %s3, %s211
      %p213 = pneg %p150
      %p214 = pneg %p147
      %p215 = scmp.lt.s32.totalorder %s20, 1
      %s216 = scalar_select %p215, %s20, 1
      %s217 = scalar_lea.vmem %s4, %s216
      %p218 = scmp.lt.s32.totalorder %s20, 1
      %s219 = scalar_select %p218, %s20, 1
      %s220 = smul.addr %s219, 170
      %s221 = smul.addr %s220, 8
      %s222 = scalar_lea.vmem %s0, %s221
      %s223 = smul.u32 8, %s21
      %p224 = scmp.lt.s32.totalorder %s20, 1
      %s225 = scalar_select %p224, %s20, 1
      %p226 = scmp.lt.s32.totalorder %s223, 31
      %s227 = scalar_select %p226, %s223, 31
      %s228 = smul.addr %s227, 4
      %s229 = smul.addr %s225, 128
      %s230 = sadd.s32 %s228, %s229
      %s231 = smul.addr %s230, 8
      %s232 = scalar_lea.vmem %s2, %s231
      %s233 = smul.u32 8, %s21
      %p234 = scmp.lt.s32.totalorder %s20, 1
      %s235 = scalar_select %p234, %s20, 1
      %s236 = scalar_lea.vmem %s3, %s235
      %p237 = scmp.lt.s32.totalorder %s20, 1
      %s238 = scalar_select %p237, %s20, 1
      %s239 = scalar_lea.vmem %s4, %s238
      %s240 = smul.u32 %s21, 8
      %s241 = smul.u32 %s240, 40
      %s242 = scalar_lea.vmem %s222, %s241
      %v243 = vld [vmem:[%s242] sm:$0xff]
      %v244 = vld [vmem:[%s242 + $0x8] sm:$0xff]
      %v245 = vld [vmem:[%s242 + $0x10] sm:$0xff]
      %v246 = vld [vmem:[%s242 + $0x18] sm:$0xff]
      %v247 = vld [vmem:[%s242 + $0x20] sm:$0x3]
      %v248 = vld [vmem:[%s242 + $0x28] sm:$0xff]
      %v249 = vld [vmem:[%s242 + $0x30] sm:$0xff]
      %v250 = vld [vmem:[%s242 + $0x38] sm:$0xff]
      %v251 = vld [vmem:[%s242 + $0x40] sm:$0xff]
      %v252 = vld [vmem:[%s242 + $0x48] sm:$0x3]
      %v253 = vld [vmem:[%s242 + $0x50] sm:$0xff]
      %v254 = vld [vmem:[%s242 + $0x58] sm:$0xff]
      %v255 = vld [vmem:[%s242 + $0x60] sm:$0xff]
      %v256 = vld [vmem:[%s242 + $0x68] sm:$0xff]
      %v257 = vld [vmem:[%s242 + $0x70] sm:$0x3]
      %v258 = vld [vmem:[%s242 + $0x78] sm:$0xff]
      %v259 = vld [vmem:[%s242 + $0x80] sm:$0xff]
      %v260 = vld [vmem:[%s242 + $0x88] sm:$0xff]
      %v261 = vld [vmem:[%s242 + $0x90] sm:$0xff]
      %v262 = vld [vmem:[%s242 + $0x98] sm:$0x3]
      %v263 = vld [vmem:[%s242 + $0xa0] sm:$0xff]
      %v264 = vld [vmem:[%s242 + $0xa8] sm:$0xff]
      %v265 = vld [vmem:[%s242 + $0xb0] sm:$0xff]
      %v266 = vld [vmem:[%s242 + $0xb8] sm:$0xff]
      %v267 = vld [vmem:[%s242 + $0xc0] sm:$0x3]
      %v268 = vld [vmem:[%s242 + $0xc8] sm:$0xff]
      %v269 = vld [vmem:[%s242 + $0xd0] sm:$0xff]
      %v270 = vld [vmem:[%s242 + $0xd8] sm:$0xff]
      %v271 = vld [vmem:[%s242 + $0xe0] sm:$0xff]
      %v272 = vld [vmem:[%s242 + $0xe8] sm:$0x3]
      %v273 = vld [vmem:[%s242 + $0xf0] sm:$0xff]
      %v274 = vld [vmem:[%s242 + $0xf8] sm:$0xff]
      %v275 = vld [vmem:[%s242 + $0x100] sm:$0xff]
      %v276 = vld [vmem:[%s242 + $0x108] sm:$0xff]
      %v277 = vld [vmem:[%s242 + $0x110] sm:$0x3]
      %v278 = vld [vmem:[%s242 + $0x118] sm:$0xff]
      %v279 = vld [vmem:[%s242 + $0x120] sm:$0xff]
      %v280 = vld [vmem:[%s242 + $0x128] sm:$0xff]
      %v281 = vld [vmem:[%s242 + $0x130] sm:$0xff]
      %v282 = vld [vmem:[%s242 + $0x138] sm:$0x3]
      %v283 = vld [vmem:[%s242 + $0x140] sm:$0xff]
      %v284 = vld [vmem:[%s242 + $0x148] sm:$0xff]
      %v285 = vld [vmem:[%s242 + $0x150] sm:$0xff]
      %v286 = vld [vmem:[%s242 + $0x158] sm:$0xff]
      %v287 = vld [vmem:[%s242 + $0x160] sm:$0x3]
      %v288 = vld [vmem:[%s242 + $0x168] sm:$0xff]
      %v289 = vld [vmem:[%s242 + $0x170] sm:$0xff]
      %v290 = vld [vmem:[%s242 + $0x178] sm:$0xff]
      %v291 = vld [vmem:[%s242 + $0x180] sm:$0xff]
      %v292 = vld [vmem:[%s242 + $0x188] sm:$0x3]
      %v293 = vld [vmem:[%s1] sm:$0xf]
      %vm334 = vcmask 1046528
      %v335 = vrot.slane %v243, 1
      %v336 = vrot.slane %v244, 1
      %v337 = vsel %vm334, %v335, %v336
      %v338 = vrot.slane %v245, 1
      %v339 = vsel %vm334, %v336, %v338
      %v340 = vrot.slane %v246, 1
      %v341 = vsel %vm334, %v338, %v340
      %v342 = vrot.slane %v247, 1
      %v343 = vsel %vm334, %v340, %v342
      %v344 = vrot.slane %v248, 1
      %v345 = vrot.slane %v249, 1
      %v346 = vsel %vm334, %v344, %v345
      %v347 = vrot.slane %v250, 1
      %v348 = vsel %vm334, %v345, %v347
      %v349 = vrot.slane %v251, 1
      %v350 = vsel %vm334, %v347, %v349
      %v351 = vrot.slane %v252, 1
      %v352 = vsel %vm334, %v349, %v351
      %v353 = vrot.slane %v253, 1
      %v354 = vrot.slane %v254, 1
      %v355 = vsel %vm334, %v353, %v354
      %v356 = vrot.slane %v255, 1
      %v357 = vsel %vm334, %v354, %v356
      %v358 = vrot.slane %v256, 1
      %v359 = vsel %vm334, %v356, %v358
      %v360 = vrot.slane %v257, 1
      %v361 = vsel %vm334, %v358, %v360
      %v362 = vrot.slane %v258, 1
      %v363 = vrot.slane %v259, 1
      %v364 = vsel %vm334, %v362, %v363
      %v365 = vrot.slane %v260, 1
      %v366 = vsel %vm334, %v363, %v365
      %v367 = vrot.slane %v261, 1
      %v368 = vsel %vm334, %v365, %v367
      %v369 = vrot.slane %v262, 1
      %v370 = vsel %vm334, %v367, %v369
      %v371 = vrot.slane %v263, 1
      %v372 = vrot.slane %v264, 1
      %v373 = vsel %vm334, %v371, %v372
      %v374 = vrot.slane %v265, 1
      %v375 = vsel %vm334, %v372, %v374
      %v376 = vrot.slane %v266, 1
      %v377 = vsel %vm334, %v374, %v376
      %v378 = vrot.slane %v267, 1
      %v379 = vsel %vm334, %v376, %v378
      %v380 = vrot.slane %v268, 1
      %v381 = vrot.slane %v269, 1
      %v382 = vsel %vm334, %v380, %v381
      %v383 = vrot.slane %v270, 1
      %v384 = vsel %vm334, %v381, %v383
      %v385 = vrot.slane %v271, 1
      %v386 = vsel %vm334, %v383, %v385
      %v387 = vrot.slane %v272, 1
      %v388 = vsel %vm334, %v385, %v387
      %v389 = vrot.slane %v273, 1
      %v390 = vrot.slane %v274, 1
      %v391 = vsel %vm334, %v389, %v390
      %v392 = vrot.slane %v275, 1
      %v393 = vsel %vm334, %v390, %v392
      %v394 = vrot.slane %v276, 1
      %v395 = vsel %vm334, %v392, %v394
      %v396 = vrot.slane %v277, 1
      %v397 = vsel %vm334, %v394, %v396
      %v398 = vrot.slane %v278, 1
      %v399 = vrot.slane %v279, 1
      %v400 = vsel %vm334, %v398, %v399
      %v401 = vrot.slane %v280, 1
      %v402 = vsel %vm334, %v399, %v401
      %v403 = vrot.slane %v281, 1
      %v404 = vsel %vm334, %v401, %v403
      %v405 = vrot.slane %v282, 1
      %v406 = vsel %vm334, %v403, %v405
      %s407 = scalar_lea.vmem %s1, 4
      %v408 = vld [vmem:[%s407] sm:$0xf]
      %vm409 = vcmask 31744
      %v410 = vsel %vm409, %v337, 0
      %v412 = vsel %vm409, %v339, 0
      %v414 = vsel %vm409, %v341, 0
      %v416 = vsel %vm409, %v343, 0
      %v418 = vsel %vm409, %v346, 0
      %v420 = vsel %vm409, %v348, 0
      %v422 = vsel %vm409, %v350, 0
      %v424 = vsel %vm409, %v352, 0
      %v426 = vsel %vm409, %v355, 0
      %v428 = vsel %vm409, %v357, 0
      %v430 = vsel %vm409, %v359, 0
      %v432 = vsel %vm409, %v361, 0
      %v434 = vsel %vm409, %v364, 0
      %v436 = vsel %vm409, %v366, 0
      %v438 = vsel %vm409, %v368, 0
      %v440 = vsel %vm409, %v370, 0
      %v442 = vsel %vm409, %v373, 0
      %v444 = vsel %vm409, %v375, 0
      %v446 = vsel %vm409, %v377, 0
      %v448 = vsel %vm409, %v379, 0
      %v450 = vsel %vm409, %v382, 0
      %v452 = vsel %vm409, %v384, 0
      %v454 = vsel %vm409, %v386, 0
      %v456 = vsel %vm409, %v388, 0
      %v458 = vsel %vm409, %v391, 0
      %v460 = vsel %vm409, %v393, 0
      %v462 = vsel %vm409, %v395, 0
      %v464 = vsel %vm409, %v397, 0
      %v466 = vsel %vm409, %v400, 0
      %v468 = vsel %vm409, %v402, 0
      %v470 = vsel %vm409, %v404, 0
      %v472 = vsel %vm409, %v406, 0
      %vm474 = vcmask 1043456
      %v476 = vsel %vm474, %v408, 0
      %478 = vmatpush.msra.mxu0 0.0
      %479 = vmatpush.msra.mxu0 0.0
      %480 = vmatpush.msra.mxu0 0.0
      %481 = vmatpush.msra.mxu0 0.0
      %482 = vmatpush.msra.mxu0 0.0
      %483 = vmatpush.msra.mxu0 0.0
      %484 = vmatpush.msra.mxu0 0.0
      %485 = vmatpush.msra.mxu0 0.0
      %486 = vmatpush.msra.mxu0 0.0
      %487 = vmatpush.msra.mxu0 0.0
      %488 = vmatpush.msra.mxu0 0.0
      %489 = vmatpush.msra.mxu0 0.0
      %490 = vmatpush.msra.mxu0 0.0
      %491 = vmatpush.msra.mxu0 0.0
      %492 = vmatpush.msra.mxu0 0.0
      %493 = vmatpush.msra.mxu0 %v476
      %494 = vmatmul.f32.gmra.mxu0 %v410
      %v495 = vpop.f32.mrf.mxu0
      %v496 = vadd.f32 0.0, %v495
      %497 = vmatmul.f32.gmra.mxu0 %v412
      %v498 = vpop.f32.mrf.mxu0
      %v499 = vadd.f32 0.0, %v498
      %500 = vmatmul.f32.gmra.mxu0 %v414
      %v501 = vpop.f32.mrf.mxu0
      %v502 = vadd.f32 0.0, %v501
      %503 = vmatmul.f32.gmra.mxu0 %v416
      %v504 = vpop.f32.mrf.mxu0
      %v505 = vadd.f32 0.0, %v504
      %506 = vmatmul.f32.gmra.mxu0 %v418
      %v507 = vpop.f32.mrf.mxu0
      %v508 = vadd.f32 0.0, %v507
      %509 = vmatmul.f32.gmra.mxu0 %v420
      %v510 = vpop.f32.mrf.mxu0
      %v511 = vadd.f32 0.0, %v510
      %512 = vmatmul.f32.gmra.mxu0 %v422
      %v513 = vpop.f32.mrf.mxu0
      %v514 = vadd.f32 0.0, %v513
      %515 = vmatmul.f32.gmra.mxu0 %v424
      %v516 = vpop.f32.mrf.mxu0
      %v517 = vadd.f32 0.0, %v516
      %518 = vmatmul.f32.gmra.mxu0 %v426
      %v519 = vpop.f32.mrf.mxu0
      %v520 = vadd.f32 0.0, %v519
      %521 = vmatmul.f32.gmra.mxu0 %v428
      %v522 = vpop.f32.mrf.mxu0
      %v523 = vadd.f32 0.0, %v522
      %524 = vmatmul.f32.gmra.mxu0 %v430
      %v525 = vpop.f32.mrf.mxu0
      %v526 = vadd.f32 0.0, %v525
      %527 = vmatmul.f32.gmra.mxu0 %v432
      %v528 = vpop.f32.mrf.mxu0
      %v529 = vadd.f32 0.0, %v528
      %530 = vmatmul.f32.gmra.mxu0 %v434
      %v531 = vpop.f32.mrf.mxu0
      %v532 = vadd.f32 0.0, %v531
      %533 = vmatmul.f32.gmra.mxu0 %v436
      %v534 = vpop.f32.mrf.mxu0
      %v535 = vadd.f32 0.0, %v534
      %536 = vmatmul.f32.gmra.mxu0 %v438
      %v537 = vpop.f32.mrf.mxu0
      %v538 = vadd.f32 0.0, %v537
      %539 = vmatmul.f32.gmra.mxu0 %v440
      %v540 = vpop.f32.mrf.mxu0
      %v541 = vadd.f32 0.0, %v540
      %542 = vmatmul.f32.gmra.mxu0 %v442
      %v543 = vpop.f32.mrf.mxu0
      %v544 = vadd.f32 0.0, %v543
      %545 = vmatmul.f32.gmra.mxu0 %v444
      %v546 = vpop.f32.mrf.mxu0
      %v547 = vadd.f32 0.0, %v546
      %548 = vmatmul.f32.gmra.mxu0 %v446
      %v549 = vpop.f32.mrf.mxu0
      %v550 = vadd.f32 0.0, %v549
      %551 = vmatmul.f32.gmra.mxu0 %v448
      %v552 = vpop.f32.mrf.mxu0
      %v553 = vadd.f32 0.0, %v552
      %554 = vmatmul.f32.gmra.mxu0 %v450
      %v555 = vpop.f32.mrf.mxu0
      %v556 = vadd.f32 0.0, %v555
      %557 = vmatmul.f32.gmra.mxu0 %v452
      %v558 = vpop.f32.mrf.mxu0
      %v559 = vadd.f32 0.0, %v558
      %560 = vmatmul.f32.gmra.mxu0 %v454
      %v561 = vpop.f32.mrf.mxu0
      %v562 = vadd.f32 0.0, %v561
      %563 = vmatmul.f32.gmra.mxu0 %v456
      %v564 = vpop.f32.mrf.mxu0
      %v565 = vadd.f32 0.0, %v564
      %566 = vmatmul.f32.gmra.mxu0 %v458
      %v567 = vpop.f32.mrf.mxu0
      %v568 = vadd.f32 0.0, %v567
      %569 = vmatmul.f32.gmra.mxu0 %v460
      %v570 = vpop.f32.mrf.mxu0
      %v571 = vadd.f32 0.0, %v570
      %572 = vmatmul.f32.gmra.mxu0 %v462
      %v573 = vpop.f32.mrf.mxu0
      %v574 = vadd.f32 0.0, %v573
      %575 = vmatmul.f32.gmra.mxu0 %v464
      %v576 = vpop.f32.mrf.mxu0
      %v577 = vadd.f32 0.0, %v576
      %578 = vmatmul.f32.gmra.mxu0 %v466
      %v579 = vpop.f32.mrf.mxu0
      %v580 = vadd.f32 0.0, %v579
      %581 = vmatmul.f32.gmra.mxu0 %v468
      %v582 = vpop.f32.mrf.mxu0
      %v583 = vadd.f32 0.0, %v582
      %584 = vmatmul.f32.gmra.mxu0 %v470
      %v585 = vpop.f32.mrf.mxu0
      %v586 = vadd.f32 0.0, %v585
      %587 = vmatmul.f32.gmra.mxu0 %v472
      %v588 = vpop.f32.mrf.mxu0
      %v589 = vadd.f32 0.0, %v588
      %590 = vdwg.mxu0
      %v591 = vsel %vm409, %v243, 0
      %v593 = vsel %vm409, %v244, 0
      %v595 = vsel %vm409, %v245, 0
      %v597 = vsel %vm409, %v246, 0
      %v599 = vsel %vm409, %v248, 0
      %v601 = vsel %vm409, %v249, 0
      %v603 = vsel %vm409, %v250, 0
      %v605 = vsel %vm409, %v251, 0
      %v607 = vsel %vm409, %v253, 0
      %v609 = vsel %vm409, %v254, 0
      %v611 = vsel %vm409, %v255, 0
      %v613 = vsel %vm409, %v256, 0
      %v615 = vsel %vm409, %v258, 0
      %v617 = vsel %vm409, %v259, 0
      %v619 = vsel %vm409, %v260, 0
      %v621 = vsel %vm409, %v261, 0
      %v623 = vsel %vm409, %v263, 0
      %v625 = vsel %vm409, %v264, 0
      %v627 = vsel %vm409, %v265, 0
      %v629 = vsel %vm409, %v266, 0
      %v631 = vsel %vm409, %v268, 0
      %v633 = vsel %vm409, %v269, 0
      %v635 = vsel %vm409, %v270, 0
      %v637 = vsel %vm409, %v271, 0
      %v639 = vsel %vm409, %v273, 0
      %v641 = vsel %vm409, %v274, 0
      %v643 = vsel %vm409, %v275, 0
      %v645 = vsel %vm409, %v276, 0
      %v647 = vsel %vm409, %v278, 0
      %v649 = vsel %vm409, %v279, 0
      %v651 = vsel %vm409, %v280, 0
      %v653 = vsel %vm409, %v281, 0
      %v656 = vsel %vm474, %v293, 0
      %658 = vmatpush.msra.mxu0 0.0
      %659 = vmatpush.msra.mxu0 0.0
      %660 = vmatpush.msra.mxu0 0.0
      %661 = vmatpush.msra.mxu0 0.0
      %662 = vmatpush.msra.mxu0 0.0
      %663 = vmatpush.msra.mxu0 0.0
      %664 = vmatpush.msra.mxu0 0.0
      %665 = vmatpush.msra.mxu0 0.0
      %666 = vmatpush.msra.mxu0 0.0
      %667 = vmatpush.msra.mxu0 0.0
      %668 = vmatpush.msra.mxu0 0.0
      %669 = vmatpush.msra.mxu0 0.0
      %670 = vmatpush.msra.mxu0 0.0
      %671 = vmatpush.msra.mxu0 0.0
      %672 = vmatpush.msra.mxu0 0.0
      %673 = vmatpush.msra.mxu0 %v656
      %674 = vmatmul.f32.gmra.mxu0 %v591
      %v675 = vpop.f32.mrf.mxu0
      %v676 = vadd.f32 %v496, %v675
      %677 = vmatmul.f32.gmra.mxu0 %v593
      %v678 = vpop.f32.mrf.mxu0
      %v679 = vadd.f32 %v499, %v678
      %680 = vmatmul.f32.gmra.mxu0 %v595
      %v681 = vpop.f32.mrf.mxu0
      %v682 = vadd.f32 %v502, %v681
      %683 = vmatmul.f32.gmra.mxu0 %v597
      %v684 = vpop.f32.mrf.mxu0
      %v685 = vadd.f32 %v505, %v684
      %686 = vmatmul.f32.gmra.mxu0 %v599
      %v687 = vpop.f32.mrf.mxu0
      %v688 = vadd.f32 %v508, %v687
      %689 = vmatmul.f32.gmra.mxu0 %v601
      %v690 = vpop.f32.mrf.mxu0
      %v691 = vadd.f32 %v511, %v690
      %692 = vmatmul.f32.gmra.mxu0 %v603
      %v693 = vpop.f32.mrf.mxu0
      %v694 = vadd.f32 %v514, %v693
      %695 = vmatmul.f32.gmra.mxu0 %v605
      %v696 = vpop.f32.mrf.mxu0
      %v697 = vadd.f32 %v517, %v696
      %698 = vmatmul.f32.gmra.mxu0 %v607
      %v699 = vpop.f32.mrf.mxu0
      %v700 = vadd.f32 %v520, %v699
      %701 = vmatmul.f32.gmra.mxu0 %v609
      %v702 = vpop.f32.mrf.mxu0
      %v703 = vadd.f32 %v523, %v702
      %704 = vmatmul.f32.gmra.mxu0 %v611
      %v705 = vpop.f32.mrf.mxu0
      %v706 = vadd.f32 %v526, %v705
      %707 = vmatmul.f32.gmra.mxu0 %v613
      %v708 = vpop.f32.mrf.mxu0
      %v709 = vadd.f32 %v529, %v708
      %710 = vmatmul.f32.gmra.mxu0 %v615
      %v711 = vpop.f32.mrf.mxu0
      %v712 = vadd.f32 %v532, %v711
      %713 = vmatmul.f32.gmra.mxu0 %v617
      %v714 = vpop.f32.mrf.mxu0
      %v715 = vadd.f32 %v535, %v714
      %716 = vmatmul.f32.gmra.mxu0 %v619
      %v717 = vpop.f32.mrf.mxu0
      %v718 = vadd.f32 %v538, %v717
      %719 = vmatmul.f32.gmra.mxu0 %v621
      %v720 = vpop.f32.mrf.mxu0
      %v721 = vadd.f32 %v541, %v720
      %722 = vmatmul.f32.gmra.mxu0 %v623
      %v723 = vpop.f32.mrf.mxu0
      %v724 = vadd.f32 %v544, %v723
      %725 = vmatmul.f32.gmra.mxu0 %v625
      %v726 = vpop.f32.mrf.mxu0
      %v727 = vadd.f32 %v547, %v726
      %728 = vmatmul.f32.gmra.mxu0 %v627
      %v729 = vpop.f32.mrf.mxu0
      %v730 = vadd.f32 %v550, %v729
      %731 = vmatmul.f32.gmra.mxu0 %v629
      %v732 = vpop.f32.mrf.mxu0
      %v733 = vadd.f32 %v553, %v732
      %734 = vmatmul.f32.gmra.mxu0 %v631
      %v735 = vpop.f32.mrf.mxu0
      %v736 = vadd.f32 %v556, %v735
      %737 = vmatmul.f32.gmra.mxu0 %v633
      %v738 = vpop.f32.mrf.mxu0
      %v739 = vadd.f32 %v559, %v738
      %740 = vmatmul.f32.gmra.mxu0 %v635
      %v741 = vpop.f32.mrf.mxu0
      %v742 = vadd.f32 %v562, %v741
      %743 = vmatmul.f32.gmra.mxu0 %v637
      %v744 = vpop.f32.mrf.mxu0
      %v745 = vadd.f32 %v565, %v744
      %746 = vmatmul.f32.gmra.mxu0 %v639
      %v747 = vpop.f32.mrf.mxu0
      %v748 = vadd.f32 %v568, %v747
      %749 = vmatmul.f32.gmra.mxu0 %v641
      %v750 = vpop.f32.mrf.mxu0
      %v751 = vadd.f32 %v571, %v750
      %752 = vmatmul.f32.gmra.mxu0 %v643
      %v753 = vpop.f32.mrf.mxu0
      %v754 = vadd.f32 %v574, %v753
      %755 = vmatmul.f32.gmra.mxu0 %v645
      %v756 = vpop.f32.mrf.mxu0
      %v757 = vadd.f32 %v577, %v756
      %758 = vmatmul.f32.gmra.mxu0 %v647
      %v759 = vpop.f32.mrf.mxu0
      %v760 = vadd.f32 %v580, %v759
      %761 = vmatmul.f32.gmra.mxu0 %v649
      %v762 = vpop.f32.mrf.mxu0
      %v763 = vadd.f32 %v583, %v762
      %764 = vmatmul.f32.gmra.mxu0 %v651
      %v765 = vpop.f32.mrf.mxu0
      %v766 = vadd.f32 %v586, %v765
      %767 = vmatmul.f32.gmra.mxu0 %v653
      %v768 = vpop.f32.mrf.mxu0
      %v769 = vadd.f32 %v589, %v768
      %770 = vdwg.mxu0
      %vm771 = vcmask 1045504
      %v772 = vrot.slane %v243, 2
      %v773 = vrot.slane %v244, 2
      %v774 = vsel %vm771, %v772, %v773
      %v775 = vrot.slane %v245, 2
      %v776 = vsel %vm771, %v773, %v775
      %v777 = vrot.slane %v246, 2
      %v778 = vsel %vm771, %v775, %v777
      %v779 = vrot.slane %v247, 2
      %v780 = vsel %vm771, %v777, %v779
      %v781 = vrot.slane %v248, 2
      %v782 = vrot.slane %v249, 2
      %v783 = vsel %vm771, %v781, %v782
      %v784 = vrot.slane %v250, 2
      %v785 = vsel %vm771, %v782, %v784
      %v786 = vrot.slane %v251, 2
      %v787 = vsel %vm771, %v784, %v786
      %v788 = vrot.slane %v252, 2
      %v789 = vsel %vm771, %v786, %v788
      %v790 = vrot.slane %v253, 2
      %v791 = vrot.slane %v254, 2
      %v792 = vsel %vm771, %v790, %v791
      %v793 = vrot.slane %v255, 2
      %v794 = vsel %vm771, %v791, %v793
      %v795 = vrot.slane %v256, 2
      %v796 = vsel %vm771, %v793, %v795
      %v797 = vrot.slane %v257, 2
      %v798 = vsel %vm771, %v795, %v797
      %v799 = vrot.slane %v258, 2
      %v800 = vrot.slane %v259, 2
      %v801 = vsel %vm771, %v799, %v800
      %v802 = vrot.slane %v260, 2
      %v803 = vsel %vm771, %v800, %v802
      %v804 = vrot.slane %v261, 2
      %v805 = vsel %vm771, %v802, %v804
      %v806 = vrot.slane %v262, 2
      %v807 = vsel %vm771, %v804, %v806
      %v808 = vrot.slane %v263, 2
      %v809 = vrot.slane %v264, 2
      %v810 = vsel %vm771, %v808, %v809
      %v811 = vrot.slane %v265, 2
      %v812 = vsel %vm771, %v809, %v811
      %v813 = vrot.slane %v266, 2
      %v814 = vsel %vm771, %v811, %v813
      %v815 = vrot.slane %v267, 2
      %v816 = vsel %vm771, %v813, %v815
      %v817 = vrot.slane %v268, 2
      %v818 = vrot.slane %v269, 2
      %v819 = vsel %vm771, %v817, %v818
      %v820 = vrot.slane %v270, 2
      %v821 = vsel %vm771, %v818, %v820
      %v822 = vrot.slane %v271, 2
      %v823 = vsel %vm771, %v820, %v822
      %v824 = vrot.slane %v272, 2
      %v825 = vsel %vm771, %v822, %v824
      %v826 = vrot.slane %v273, 2
      %v827 = vrot.slane %v274, 2
      %v828 = vsel %vm771, %v826, %v827
      %v829 = vrot.slane %v275, 2
      %v830 = vsel %vm771, %v827, %v829
      %v831 = vrot.slane %v276, 2
      %v832 = vsel %vm771, %v829, %v831
      %v833 = vrot.slane %v277, 2
      %v834 = vsel %vm771, %v831, %v833
      %v835 = vrot.slane %v278, 2
      %v836 = vrot.slane %v279, 2
      %v837 = vsel %vm771, %v835, %v836
      %v838 = vrot.slane %v280, 2
      %v839 = vsel %vm771, %v836, %v838
      %v840 = vrot.slane %v281, 2
      %v841 = vsel %vm771, %v838, %v840
      %v842 = vrot.slane %v282, 2
      %v843 = vsel %vm771, %v840, %v842
      %s844 = scalar_lea.vmem %s1, 8
      %v845 = vld [vmem:[%s844] sm:$0xf]
      %v846 = vsel %vm409, %v774, 0
      %v848 = vsel %vm409, %v776, 0
      %v850 = vsel %vm409, %v778, 0
      %v852 = vsel %vm409, %v780, 0
      %v854 = vsel %vm409, %v783, 0
      %v856 = vsel %vm409, %v785, 0
      %v858 = vsel %vm409, %v787, 0
      %v860 = vsel %vm409, %v789, 0
      %v862 = vsel %vm409, %v792, 0
      %v864 = vsel %vm409, %v794, 0
      %v866 = vsel %vm409, %v796, 0
      %v868 = vsel %vm409, %v798, 0
      %v870 = vsel %vm409, %v801, 0
      %v872 = vsel %vm409, %v803, 0
      %v874 = vsel %vm409, %v805, 0
      %v876 = vsel %vm409, %v807, 0
      %v878 = vsel %vm409, %v810, 0
      %v880 = vsel %vm409, %v812, 0
      %v882 = vsel %vm409, %v814, 0
      %v884 = vsel %vm409, %v816, 0
      %v886 = vsel %vm409, %v819, 0
      %v888 = vsel %vm409, %v821, 0
      %v890 = vsel %vm409, %v823, 0
      %v892 = vsel %vm409, %v825, 0
      %v894 = vsel %vm409, %v828, 0
      %v896 = vsel %vm409, %v830, 0
      %v898 = vsel %vm409, %v832, 0
      %v900 = vsel %vm409, %v834, 0
      %v902 = vsel %vm409, %v837, 0
      %v904 = vsel %vm409, %v839, 0
      %v906 = vsel %vm409, %v841, 0
      %v908 = vsel %vm409, %v843, 0
      %v911 = vsel %vm474, %v845, 0
      %913 = vmatpush.msra.mxu0 0.0
      %914 = vmatpush.msra.mxu0 0.0
      %915 = vmatpush.msra.mxu0 0.0
      %916 = vmatpush.msra.mxu0 0.0
      %917 = vmatpush.msra.mxu0 0.0
      %918 = vmatpush.msra.mxu0 0.0
      %919 = vmatpush.msra.mxu0 0.0
      %920 = vmatpush.msra.mxu0 0.0
      %921 = vmatpush.msra.mxu0 0.0
      %922 = vmatpush.msra.mxu0 0.0
      %923 = vmatpush.msra.mxu0 0.0
      %924 = vmatpush.msra.mxu0 0.0
      %925 = vmatpush.msra.mxu0 0.0
      %926 = vmatpush.msra.mxu0 0.0
      %927 = vmatpush.msra.mxu0 0.0
      %928 = vmatpush.msra.mxu0 %v911
      %929 = vmatmul.f32.gmra.mxu0 %v846
      %v930 = vpop.f32.mrf.mxu0
      %v931 = vadd.f32 0.0, %v930
      %932 = vmatmul.f32.gmra.mxu0 %v848
      %v933 = vpop.f32.mrf.mxu0
      %v934 = vadd.f32 0.0, %v933
      %935 = vmatmul.f32.gmra.mxu0 %v850
      %v936 = vpop.f32.mrf.mxu0
      %v937 = vadd.f32 0.0, %v936
      %938 = vmatmul.f32.gmra.mxu0 %v852
      %v939 = vpop.f32.mrf.mxu0
      %v940 = vadd.f32 0.0, %v939
      %941 = vmatmul.f32.gmra.mxu0 %v854
      %v942 = vpop.f32.mrf.mxu0
      %v943 = vadd.f32 0.0, %v942
      %944 = vmatmul.f32.gmra.mxu0 %v856
      %v945 = vpop.f32.mrf.mxu0
      %v946 = vadd.f32 0.0, %v945
      %947 = vmatmul.f32.gmra.mxu0 %v858
      %v948 = vpop.f32.mrf.mxu0
      %v949 = vadd.f32 0.0, %v948
      %950 = vmatmul.f32.gmra.mxu0 %v860
      %v951 = vpop.f32.mrf.mxu0
      %v952 = vadd.f32 0.0, %v951
      %953 = vmatmul.f32.gmra.mxu0 %v862
      %v954 = vpop.f32.mrf.mxu0
      %v955 = vadd.f32 0.0, %v954
      %956 = vmatmul.f32.gmra.mxu0 %v864
      %v957 = vpop.f32.mrf.mxu0
      %v958 = vadd.f32 0.0, %v957
      %959 = vmatmul.f32.gmra.mxu0 %v866
      %v960 = vpop.f32.mrf.mxu0
      %v961 = vadd.f32 0.0, %v960
      %962 = vmatmul.f32.gmra.mxu0 %v868
      %v963 = vpop.f32.mrf.mxu0
      %v964 = vadd.f32 0.0, %v963
      %965 = vmatmul.f32.gmra.mxu0 %v870
      %v966 = vpop.f32.mrf.mxu0
      %v967 = vadd.f32 0.0, %v966
      %968 = vmatmul.f32.gmra.mxu0 %v872
      %v969 = vpop.f32.mrf.mxu0
      %v970 = vadd.f32 0.0, %v969
      %971 = vmatmul.f32.gmra.mxu0 %v874
      %v972 = vpop.f32.mrf.mxu0
      %v973 = vadd.f32 0.0, %v972
      %974 = vmatmul.f32.gmra.mxu0 %v876
      %v975 = vpop.f32.mrf.mxu0
      %v976 = vadd.f32 0.0, %v975
      %977 = vmatmul.f32.gmra.mxu0 %v878
      %v978 = vpop.f32.mrf.mxu0
      %v979 = vadd.f32 0.0, %v978
      %980 = vmatmul.f32.gmra.mxu0 %v880
      %v981 = vpop.f32.mrf.mxu0
      %v982 = vadd.f32 0.0, %v981
      %983 = vmatmul.f32.gmra.mxu0 %v882
      %v984 = vpop.f32.mrf.mxu0
      %v985 = vadd.f32 0.0, %v984
      %986 = vmatmul.f32.gmra.mxu0 %v884
      %v987 = vpop.f32.mrf.mxu0
      %v988 = vadd.f32 0.0, %v987
      %989 = vmatmul.f32.gmra.mxu0 %v886
      %v990 = vpop.f32.mrf.mxu0
      %v991 = vadd.f32 0.0, %v990
      %992 = vmatmul.f32.gmra.mxu0 %v888
      %v993 = vpop.f32.mrf.mxu0
      %v994 = vadd.f32 0.0, %v993
      %995 = vmatmul.f32.gmra.mxu0 %v890
      %v996 = vpop.f32.mrf.mxu0
      %v997 = vadd.f32 0.0, %v996
      %998 = vmatmul.f32.gmra.mxu0 %v892
      %v999 = vpop.f32.mrf.mxu0
      %v1000 = vadd.f32 0.0, %v999
      %1001 = vmatmul.f32.gmra.mxu0 %v894
      %v1002 = vpop.f32.mrf.mxu0
      %v1003 = vadd.f32 0.0, %v1002
      %1004 = vmatmul.f32.gmra.mxu0 %v896
      %v1005 = vpop.f32.mrf.mxu0
      %v1006 = vadd.f32 0.0, %v1005
      %1007 = vmatmul.f32.gmra.mxu0 %v898
      %v1008 = vpop.f32.mrf.mxu0
      %v1009 = vadd.f32 0.0, %v1008
      %1010 = vmatmul.f32.gmra.mxu0 %v900
      %v1011 = vpop.f32.mrf.mxu0
      %v1012 = vadd.f32 0.0, %v1011
      %1013 = vmatmul.f32.gmra.mxu0 %v902
      %v1014 = vpop.f32.mrf.mxu0
      %v1015 = vadd.f32 0.0, %v1014
      %1016 = vmatmul.f32.gmra.mxu0 %v904
      %v1017 = vpop.f32.mrf.mxu0
      %v1018 = vadd.f32 0.0, %v1017
      %1019 = vmatmul.f32.gmra.mxu0 %v906
      %v1020 = vpop.f32.mrf.mxu0
      %v1021 = vadd.f32 0.0, %v1020
      %1022 = vmatmul.f32.gmra.mxu0 %v908
      %v1023 = vpop.f32.mrf.mxu0
      %v1024 = vadd.f32 0.0, %v1023
      %1025 = vdwg.mxu0
      %v1026 = vadd.f32 %v676, %v931
      %v1027 = vadd.f32 %v679, %v934
      %v1028 = vadd.f32 %v682, %v937
      %v1029 = vadd.f32 %v685, %v940
      %v1030 = vadd.f32 %v688, %v943
      %v1031 = vadd.f32 %v691, %v946
      %v1032 = vadd.f32 %v694, %v949
      %v1033 = vadd.f32 %v697, %v952
      %v1034 = vadd.f32 %v700, %v955
      %v1035 = vadd.f32 %v703, %v958
      %v1036 = vadd.f32 %v706, %v961
      %v1037 = vadd.f32 %v709, %v964
      %v1038 = vadd.f32 %v712, %v967
      %v1039 = vadd.f32 %v715, %v970
      %v1040 = vadd.f32 %v718, %v973
      %v1041 = vadd.f32 %v721, %v976
      %v1042 = vadd.f32 %v724, %v979
      %v1043 = vadd.f32 %v727, %v982
      %v1044 = vadd.f32 %v730, %v985
      %v1045 = vadd.f32 %v733, %v988
      %v1046 = vadd.f32 %v736, %v991
      %v1047 = vadd.f32 %v739, %v994
      %v1048 = vadd.f32 %v742, %v997
      %v1049 = vadd.f32 %v745, %v1000
      %v1050 = vadd.f32 %v748, %v1003
      %v1051 = vadd.f32 %v751, %v1006
      %v1052 = vadd.f32 %v754, %v1009
      %v1053 = vadd.f32 %v757, %v1012
      %v1054 = vadd.f32 %v760, %v1015
      %v1055 = vadd.f32 %v763, %v1018
      %v1056 = vadd.f32 %v766, %v1021
      %v1057 = vadd.f32 %v769, %v1024
      %s1058 = scalar_lea.vmem %s1, 12
      %v1059 = vld [vmem:[%s1058] sm:$0xf]
      %v1061 = vsel %vm409, %v283, 0
      %v1064 = vsel %vm409, %v284, 0
      %v1067 = vsel %vm409, %v285, 0
      %v1070 = vsel %vm409, %v286, 0
      %v1073 = vsel %vm474, %v1059, 0
      %1075 = vmatpush.msra.mxu0 0.0
      %1076 = vmatpush.msra.mxu0 0.0
      %1077 = vmatpush.msra.mxu0 0.0
      %1078 = vmatpush.msra.mxu0 0.0
      %1079 = vmatpush.msra.mxu0 0.0
      %1080 = vmatpush.msra.mxu0 0.0
      %1081 = vmatpush.msra.mxu0 0.0
      %1082 = vmatpush.msra.mxu0 0.0
      %1083 = vmatpush.msra.mxu0 0.0
      %1084 = vmatpush.msra.mxu0 0.0
      %1085 = vmatpush.msra.mxu0 0.0
      %1086 = vmatpush.msra.mxu0 0.0
      %1087 = vmatpush.msra.mxu0 0.0
      %1088 = vmatpush.msra.mxu0 0.0
      %1089 = vmatpush.msra.mxu0 0.0
      %1090 = vmatpush.msra.mxu0 %v1073
      %1091 = vmatmul.f32.gmra.mxu0 %v599
      %v1092 = vpop.f32.mrf.mxu0
      %v1093 = vadd.f32 0.0, %v1092
      %1094 = vmatmul.f32.gmra.mxu0 %v601
      %v1095 = vpop.f32.mrf.mxu0
      %v1096 = vadd.f32 0.0, %v1095
      %1097 = vmatmul.f32.gmra.mxu0 %v603
      %v1098 = vpop.f32.mrf.mxu0
      %v1099 = vadd.f32 0.0, %v1098
      %1100 = vmatmul.f32.gmra.mxu0 %v605
      %v1101 = vpop.f32.mrf.mxu0
      %v1102 = vadd.f32 0.0, %v1101
      %1103 = vmatmul.f32.gmra.mxu0 %v607
      %v1104 = vpop.f32.mrf.mxu0
      %v1105 = vadd.f32 0.0, %v1104
      %1106 = vmatmul.f32.gmra.mxu0 %v609
      %v1107 = vpop.f32.mrf.mxu0
      %v1108 = vadd.f32 0.0, %v1107
      %1109 = vmatmul.f32.gmra.mxu0 %v611
      %v1110 = vpop.f32.mrf.mxu0
      %v1111 = vadd.f32 0.0, %v1110
      %1112 = vmatmul.f32.gmra.mxu0 %v613
      %v1113 = vpop.f32.mrf.mxu0
      %v1114 = vadd.f32 0.0, %v1113
      %1115 = vmatmul.f32.gmra.mxu0 %v615
      %v1116 = vpop.f32.mrf.mxu0
      %v1117 = vadd.f32 0.0, %v1116
      %1118 = vmatmul.f32.gmra.mxu0 %v617
      %v1119 = vpop.f32.mrf.mxu0
      %v1120 = vadd.f32 0.0, %v1119
      %1121 = vmatmul.f32.gmra.mxu0 %v619
      %v1122 = vpop.f32.mrf.mxu0
      %v1123 = vadd.f32 0.0, %v1122
      %1124 = vmatmul.f32.gmra.mxu0 %v621
      %v1125 = vpop.f32.mrf.mxu0
      %v1126 = vadd.f32 0.0, %v1125
      %1127 = vmatmul.f32.gmra.mxu0 %v623
      %v1128 = vpop.f32.mrf.mxu0
      %v1129 = vadd.f32 0.0, %v1128
      %1130 = vmatmul.f32.gmra.mxu0 %v625
      %v1131 = vpop.f32.mrf.mxu0
      %v1132 = vadd.f32 0.0, %v1131
      %1133 = vmatmul.f32.gmra.mxu0 %v627
      %v1134 = vpop.f32.mrf.mxu0
      %v1135 = vadd.f32 0.0, %v1134
      %1136 = vmatmul.f32.gmra.mxu0 %v629
      %v1137 = vpop.f32.mrf.mxu0
      %v1138 = vadd.f32 0.0, %v1137
      %1139 = vmatmul.f32.gmra.mxu0 %v631
      %v1140 = vpop.f32.mrf.mxu0
      %v1141 = vadd.f32 0.0, %v1140
      %1142 = vmatmul.f32.gmra.mxu0 %v633
      %v1143 = vpop.f32.mrf.mxu0
      %v1144 = vadd.f32 0.0, %v1143
      %1145 = vmatmul.f32.gmra.mxu0 %v635
      %v1146 = vpop.f32.mrf.mxu0
      %v1147 = vadd.f32 0.0, %v1146
      %1148 = vmatmul.f32.gmra.mxu0 %v637
      %v1149 = vpop.f32.mrf.mxu0
      %v1150 = vadd.f32 0.0, %v1149
      %1151 = vmatmul.f32.gmra.mxu0 %v639
      %v1152 = vpop.f32.mrf.mxu0
      %v1153 = vadd.f32 0.0, %v1152
      %1154 = vmatmul.f32.gmra.mxu0 %v641
      %v1155 = vpop.f32.mrf.mxu0
      %v1156 = vadd.f32 0.0, %v1155
      %1157 = vmatmul.f32.gmra.mxu0 %v643
      %v1158 = vpop.f32.mrf.mxu0
      %v1159 = vadd.f32 0.0, %v1158
      %1160 = vmatmul.f32.gmra.mxu0 %v645
      %v1161 = vpop.f32.mrf.mxu0
      %v1162 = vadd.f32 0.0, %v1161
      %1163 = vmatmul.f32.gmra.mxu0 %v647
      %v1164 = vpop.f32.mrf.mxu0
      %v1165 = vadd.f32 0.0, %v1164
      %1166 = vmatmul.f32.gmra.mxu0 %v649
      %v1167 = vpop.f32.mrf.mxu0
      %v1168 = vadd.f32 0.0, %v1167
      %1169 = vmatmul.f32.gmra.mxu0 %v651
      %v1170 = vpop.f32.mrf.mxu0
      %v1171 = vadd.f32 0.0, %v1170
      %1172 = vmatmul.f32.gmra.mxu0 %v653
      %v1173 = vpop.f32.mrf.mxu0
      %v1174 = vadd.f32 0.0, %v1173
      %1175 = vmatmul.f32.gmra.mxu0 %v1061
      %v1176 = vpop.f32.mrf.mxu0
      %v1177 = vadd.f32 0.0, %v1176
      %1178 = vmatmul.f32.gmra.mxu0 %v1064
      %v1179 = vpop.f32.mrf.mxu0
      %v1180 = vadd.f32 0.0, %v1179
      %1181 = vmatmul.f32.gmra.mxu0 %v1067
      %v1182 = vpop.f32.mrf.mxu0
      %v1183 = vadd.f32 0.0, %v1182
      %1184 = vmatmul.f32.gmra.mxu0 %v1070
      %v1185 = vpop.f32.mrf.mxu0
      %v1186 = vadd.f32 0.0, %v1185
      %1187 = vdwg.mxu0
      %v1188 = vadd.f32 %v1026, %v1093
      %v1189 = vadd.f32 %v1027, %v1096
      %v1190 = vadd.f32 %v1028, %v1099
      %v1191 = vadd.f32 %v1029, %v1102
      %v1192 = vadd.f32 %v1030, %v1105
      %v1193 = vadd.f32 %v1031, %v1108
      %v1194 = vadd.f32 %v1032, %v1111
      %v1195 = vadd.f32 %v1033, %v1114
      %v1196 = vadd.f32 %v1034, %v1117
      %v1197 = vadd.f32 %v1035, %v1120
      %v1198 = vadd.f32 %v1036, %v1123
      %v1199 = vadd.f32 %v1037, %v1126
      %v1200 = vadd.f32 %v1038, %v1129
      %v1201 = vadd.f32 %v1039, %v1132
      %v1202 = vadd.f32 %v1040, %v1135
      %v1203 = vadd.f32 %v1041, %v1138
      %v1204 = vadd.f32 %v1042, %v1141
      %v1205 = vadd.f32 %v1043, %v1144
      %v1206 = vadd.f32 %v1044, %v1147
      %v1207 = vadd.f32 %v1045, %v1150
      %v1208 = vadd.f32 %v1046, %v1153
      %v1209 = vadd.f32 %v1047, %v1156
      %v1210 = vadd.f32 %v1048, %v1159
      %v1211 = vadd.f32 %v1049, %v1162
      %v1212 = vadd.f32 %v1050, %v1165
      %v1213 = vadd.f32 %v1051, %v1168
      %v1214 = vadd.f32 %v1052, %v1171
      %v1215 = vadd.f32 %v1053, %v1174
      %v1216 = vadd.f32 %v1054, %v1177
      %v1217 = vadd.f32 %v1055, %v1180
      %v1218 = vadd.f32 %v1056, %v1183
      %v1219 = vadd.f32 %v1057, %v1186
      %v1221 = vrot.slane %v283, 1
      %v1222 = vrot.slane %v284, 1
      %v1223 = vsel %vm334, %v1221, %v1222
      %v1224 = vrot.slane %v285, 1
      %v1225 = vsel %vm334, %v1222, %v1224
      %v1226 = vrot.slane %v286, 1
      %v1227 = vsel %vm334, %v1224, %v1226
      %v1228 = vrot.slane %v287, 1
      %v1229 = vsel %vm334, %v1226, %v1228
      %s1230 = scalar_lea.vmem %s1, 16
      %v1231 = vld [vmem:[%s1230] sm:$0xf]
      %v1232 = vsel %vm409, %v1223, 0
      %v1234 = vsel %vm409, %v1225, 0
      %v1236 = vsel %vm409, %v1227, 0
      %v1238 = vsel %vm409, %v1229, 0
      %v1241 = vsel %vm474, %v1231, 0
      %1243 = vmatpush.msra.mxu0 0.0
      %1244 = vmatpush.msra.mxu0 0.0
      %1245 = vmatpush.msra.mxu0 0.0
      %1246 = vmatpush.msra.mxu0 0.0
      %1247 = vmatpush.msra.mxu0 0.0
      %1248 = vmatpush.msra.mxu0 0.0
      %1249 = vmatpush.msra.mxu0 0.0
      %1250 = vmatpush.msra.mxu0 0.0
      %1251 = vmatpush.msra.mxu0 0.0
      %1252 = vmatpush.msra.mxu0 0.0
      %1253 = vmatpush.msra.mxu0 0.0
      %1254 = vmatpush.msra.mxu0 0.0
      %1255 = vmatpush.msra.mxu0 0.0
      %1256 = vmatpush.msra.mxu0 0.0
      %1257 = vmatpush.msra.mxu0 0.0
      %1258 = vmatpush.msra.mxu0 %v1241
      %1259 = vmatmul.f32.gmra.mxu0 %v418
      %v1260 = vpop.f32.mrf.mxu0
      %v1261 = vadd.f32 0.0, %v1260
      %1262 = vmatmul.f32.gmra.mxu0 %v420
      %v1263 = vpop.f32.mrf.mxu0
      %v1264 = vadd.f32 0.0, %v1263
      %1265 = vmatmul.f32.gmra.mxu0 %v422
      %v1266 = vpop.f32.mrf.mxu0
      %v1267 = vadd.f32 0.0, %v1266
      %1268 = vmatmul.f32.gmra.mxu0 %v424
      %v1269 = vpop.f32.mrf.mxu0
      %v1270 = vadd.f32 0.0, %v1269
      %1271 = vmatmul.f32.gmra.mxu0 %v426
      %v1272 = vpop.f32.mrf.mxu0
      %v1273 = vadd.f32 0.0, %v1272
      %1274 = vmatmul.f32.gmra.mxu0 %v428
      %v1275 = vpop.f32.mrf.mxu0
      %v1276 = vadd.f32 0.0, %v1275
      %1277 = vmatmul.f32.gmra.mxu0 %v430
      %v1278 = vpop.f32.mrf.mxu0
      %v1279 = vadd.f32 0.0, %v1278
      %1280 = vmatmul.f32.gmra.mxu0 %v432
      %v1281 = vpop.f32.mrf.mxu0
      %v1282 = vadd.f32 0.0, %v1281
      %1283 = vmatmul.f32.gmra.mxu0 %v434
      %v1284 = vpop.f32.mrf.mxu0
      %v1285 = vadd.f32 0.0, %v1284
      %1286 = vmatmul.f32.gmra.mxu0 %v436
      %v1287 = vpop.f32.mrf.mxu0
      %v1288 = vadd.f32 0.0, %v1287
      %1289 = vmatmul.f32.gmra.mxu0 %v438
      %v1290 = vpop.f32.mrf.mxu0
      %v1291 = vadd.f32 0.0, %v1290
      %1292 = vmatmul.f32.gmra.mxu0 %v440
      %v1293 = vpop.f32.mrf.mxu0
      %v1294 = vadd.f32 0.0, %v1293
      %1295 = vmatmul.f32.gmra.mxu0 %v442
      %v1296 = vpop.f32.mrf.mxu0
      %v1297 = vadd.f32 0.0, %v1296
      %1298 = vmatmul.f32.gmra.mxu0 %v444
      %v1299 = vpop.f32.mrf.mxu0
      %v1300 = vadd.f32 0.0, %v1299
      %1301 = vmatmul.f32.gmra.mxu0 %v446
      %v1302 = vpop.f32.mrf.mxu0
      %v1303 = vadd.f32 0.0, %v1302
      %1304 = vmatmul.f32.gmra.mxu0 %v448
      %v1305 = vpop.f32.mrf.mxu0
      %v1306 = vadd.f32 0.0, %v1305
      %1307 = vmatmul.f32.gmra.mxu0 %v450
      %v1308 = vpop.f32.mrf.mxu0
      %v1309 = vadd.f32 0.0, %v1308
      %1310 = vmatmul.f32.gmra.mxu0 %v452
      %v1311 = vpop.f32.mrf.mxu0
      %v1312 = vadd.f32 0.0, %v1311
      %1313 = vmatmul.f32.gmra.mxu0 %v454
      %v1314 = vpop.f32.mrf.mxu0
      %v1315 = vadd.f32 0.0, %v1314
      %1316 = vmatmul.f32.gmra.mxu0 %v456
      %v1317 = vpop.f32.mrf.mxu0
      %v1318 = vadd.f32 0.0, %v1317
      %1319 = vmatmul.f32.gmra.mxu0 %v458
      %v1320 = vpop.f32.mrf.mxu0
      %v1321 = vadd.f32 0.0, %v1320
      %1322 = vmatmul.f32.gmra.mxu0 %v460
      %v1323 = vpop.f32.mrf.mxu0
      %v1324 = vadd.f32 0.0, %v1323
      %1325 = vmatmul.f32.gmra.mxu0 %v462
      %v1326 = vpop.f32.mrf.mxu0
      %v1327 = vadd.f32 0.0, %v1326
      %1328 = vmatmul.f32.gmra.mxu0 %v464
      %v1329 = vpop.f32.mrf.mxu0
      %v1330 = vadd.f32 0.0, %v1329
      %1331 = vmatmul.f32.gmra.mxu0 %v466
      %v1332 = vpop.f32.mrf.mxu0
      %v1333 = vadd.f32 0.0, %v1332
      %1334 = vmatmul.f32.gmra.mxu0 %v468
      %v1335 = vpop.f32.mrf.mxu0
      %v1336 = vadd.f32 0.0, %v1335
      %1337 = vmatmul.f32.gmra.mxu0 %v470
      %v1338 = vpop.f32.mrf.mxu0
      %v1339 = vadd.f32 0.0, %v1338
      %1340 = vmatmul.f32.gmra.mxu0 %v472
      %v1341 = vpop.f32.mrf.mxu0
      %v1342 = vadd.f32 0.0, %v1341
      %1343 = vmatmul.f32.gmra.mxu0 %v1232
      %v1344 = vpop.f32.mrf.mxu0
      %v1345 = vadd.f32 0.0, %v1344
      %1346 = vmatmul.f32.gmra.mxu0 %v1234
      %v1347 = vpop.f32.mrf.mxu0
      %v1348 = vadd.f32 0.0, %v1347
      %1349 = vmatmul.f32.gmra.mxu0 %v1236
      %v1350 = vpop.f32.mrf.mxu0
      %v1351 = vadd.f32 0.0, %v1350
      %1352 = vmatmul.f32.gmra.mxu0 %v1238
      %v1353 = vpop.f32.mrf.mxu0
      %v1354 = vadd.f32 0.0, %v1353
      %1355 = vdwg.mxu0
      %v1356 = vadd.f32 %v1188, %v1261
      %v1357 = vadd.f32 %v1189, %v1264
      %v1358 = vadd.f32 %v1190, %v1267
      %v1359 = vadd.f32 %v1191, %v1270
      %v1360 = vadd.f32 %v1192, %v1273
      %v1361 = vadd.f32 %v1193, %v1276
      %v1362 = vadd.f32 %v1194, %v1279
      %v1363 = vadd.f32 %v1195, %v1282
      %v1364 = vadd.f32 %v1196, %v1285
      %v1365 = vadd.f32 %v1197, %v1288
      %v1366 = vadd.f32 %v1198, %v1291
      %v1367 = vadd.f32 %v1199, %v1294
      %v1368 = vadd.f32 %v1200, %v1297
      %v1369 = vadd.f32 %v1201, %v1300
      %v1370 = vadd.f32 %v1202, %v1303
      %v1371 = vadd.f32 %v1203, %v1306
      %v1372 = vadd.f32 %v1204, %v1309
      %v1373 = vadd.f32 %v1205, %v1312
      %v1374 = vadd.f32 %v1206, %v1315
      %v1375 = vadd.f32 %v1207, %v1318
      %v1376 = vadd.f32 %v1208, %v1321
      %v1377 = vadd.f32 %v1209, %v1324
      %v1378 = vadd.f32 %v1210, %v1327
      %v1379 = vadd.f32 %v1211, %v1330
      %v1380 = vadd.f32 %v1212, %v1333
      %v1381 = vadd.f32 %v1213, %v1336
      %v1382 = vadd.f32 %v1214, %v1339
      %v1383 = vadd.f32 %v1215, %v1342
      %v1384 = vadd.f32 %v1216, %v1345
      %v1385 = vadd.f32 %v1217, %v1348
      %v1386 = vadd.f32 %v1218, %v1351
      %v1387 = vadd.f32 %v1219, %v1354
      %v1388 = vrot.slane %v283, 2
      %v1389 = vrot.slane %v284, 2
      %v1390 = vsel %vm771, %v1388, %v1389
      %v1391 = vrot.slane %v285, 2
      %v1392 = vsel %vm771, %v1389, %v1391
      %v1393 = vrot.slane %v286, 2
      %v1394 = vsel %vm771, %v1391, %v1393
      %v1395 = vrot.slane %v287, 2
      %v1396 = vsel %vm771, %v1393, %v1395
      %s1397 = scalar_lea.vmem %s1, 20
      %v1398 = vld [vmem:[%s1397] sm:$0xf]
      %v1399 = vsel %vm409, %v1390, 0
      %v1401 = vsel %vm409, %v1392, 0
      %v1403 = vsel %vm409, %v1394, 0
      %v1405 = vsel %vm409, %v1396, 0
      %v1408 = vsel %vm474, %v1398, 0
      %1410 = vmatpush.msra.mxu0 0.0
      %1411 = vmatpush.msra.mxu0 0.0
      %1412 = vmatpush.msra.mxu0 0.0
      %1413 = vmatpush.msra.mxu0 0.0
      %1414 = vmatpush.msra.mxu0 0.0
      %1415 = vmatpush.msra.mxu0 0.0
      %1416 = vmatpush.msra.mxu0 0.0
      %1417 = vmatpush.msra.mxu0 0.0
      %1418 = vmatpush.msra.mxu0 0.0
      %1419 = vmatpush.msra.mxu0 0.0
      %1420 = vmatpush.msra.mxu0 0.0
      %1421 = vmatpush.msra.mxu0 0.0
      %1422 = vmatpush.msra.mxu0 0.0
      %1423 = vmatpush.msra.mxu0 0.0
      %1424 = vmatpush.msra.mxu0 0.0
      %1425 = vmatpush.msra.mxu0 %v1408
      %1426 = vmatmul.f32.gmra.mxu0 %v854
      %v1427 = vpop.f32.mrf.mxu0
      %v1428 = vadd.f32 0.0, %v1427
      %1429 = vmatmul.f32.gmra.mxu0 %v856
      %v1430 = vpop.f32.mrf.mxu0
      %v1431 = vadd.f32 0.0, %v1430
      %1432 = vmatmul.f32.gmra.mxu0 %v858
      %v1433 = vpop.f32.mrf.mxu0
      %v1434 = vadd.f32 0.0, %v1433
      %1435 = vmatmul.f32.gmra.mxu0 %v860
      %v1436 = vpop.f32.mrf.mxu0
      %v1437 = vadd.f32 0.0, %v1436
      %1438 = vmatmul.f32.gmra.mxu0 %v862
      %v1439 = vpop.f32.mrf.mxu0
      %v1440 = vadd.f32 0.0, %v1439
      %1441 = vmatmul.f32.gmra.mxu0 %v864
      %v1442 = vpop.f32.mrf.mxu0
      %v1443 = vadd.f32 0.0, %v1442
      %1444 = vmatmul.f32.gmra.mxu0 %v866
      %v1445 = vpop.f32.mrf.mxu0
      %v1446 = vadd.f32 0.0, %v1445
      %1447 = vmatmul.f32.gmra.mxu0 %v868
      %v1448 = vpop.f32.mrf.mxu0
      %v1449 = vadd.f32 0.0, %v1448
      %1450 = vmatmul.f32.gmra.mxu0 %v870
      %v1451 = vpop.f32.mrf.mxu0
      %v1452 = vadd.f32 0.0, %v1451
      %1453 = vmatmul.f32.gmra.mxu0 %v872
      %v1454 = vpop.f32.mrf.mxu0
      %v1455 = vadd.f32 0.0, %v1454
      %1456 = vmatmul.f32.gmra.mxu0 %v874
      %v1457 = vpop.f32.mrf.mxu0
      %v1458 = vadd.f32 0.0, %v1457
      %1459 = vmatmul.f32.gmra.mxu0 %v876
      %v1460 = vpop.f32.mrf.mxu0
      %v1461 = vadd.f32 0.0, %v1460
      %1462 = vmatmul.f32.gmra.mxu0 %v878
      %v1463 = vpop.f32.mrf.mxu0
      %v1464 = vadd.f32 0.0, %v1463
      %1465 = vmatmul.f32.gmra.mxu0 %v880
      %v1466 = vpop.f32.mrf.mxu0
      %v1467 = vadd.f32 0.0, %v1466
      %1468 = vmatmul.f32.gmra.mxu0 %v882
      %v1469 = vpop.f32.mrf.mxu0
      %v1470 = vadd.f32 0.0, %v1469
      %1471 = vmatmul.f32.gmra.mxu0 %v884
      %v1472 = vpop.f32.mrf.mxu0
      %v1473 = vadd.f32 0.0, %v1472
      %1474 = vmatmul.f32.gmra.mxu0 %v886
      %v1475 = vpop.f32.mrf.mxu0
      %v1476 = vadd.f32 0.0, %v1475
      %1477 = vmatmul.f32.gmra.mxu0 %v888
      %v1478 = vpop.f32.mrf.mxu0
      %v1479 = vadd.f32 0.0, %v1478
      %1480 = vmatmul.f32.gmra.mxu0 %v890
      %v1481 = vpop.f32.mrf.mxu0
      %v1482 = vadd.f32 0.0, %v1481
      %1483 = vmatmul.f32.gmra.mxu0 %v892
      %v1484 = vpop.f32.mrf.mxu0
      %v1485 = vadd.f32 0.0, %v1484
      %1486 = vmatmul.f32.gmra.mxu0 %v894
      %v1487 = vpop.f32.mrf.mxu0
      %v1488 = vadd.f32 0.0, %v1487
      %1489 = vmatmul.f32.gmra.mxu0 %v896
      %v1490 = vpop.f32.mrf.mxu0
      %v1491 = vadd.f32 0.0, %v1490
      %1492 = vmatmul.f32.gmra.mxu0 %v898
      %v1493 = vpop.f32.mrf.mxu0
      %v1494 = vadd.f32 0.0, %v1493
      %1495 = vmatmul.f32.gmra.mxu0 %v900
      %v1496 = vpop.f32.mrf.mxu0
      %v1497 = vadd.f32 0.0, %v1496
      %1498 = vmatmul.f32.gmra.mxu0 %v902
      %v1499 = vpop.f32.mrf.mxu0
      %v1500 = vadd.f32 0.0, %v1499
      %1501 = vmatmul.f32.gmra.mxu0 %v904
      %v1502 = vpop.f32.mrf.mxu0
      %v1503 = vadd.f32 0.0, %v1502
      %1504 = vmatmul.f32.gmra.mxu0 %v906
      %v1505 = vpop.f32.mrf.mxu0
      %v1506 = vadd.f32 0.0, %v1505
      %1507 = vmatmul.f32.gmra.mxu0 %v908
      %v1508 = vpop.f32.mrf.mxu0
      %v1509 = vadd.f32 0.0, %v1508
      %1510 = vmatmul.f32.gmra.mxu0 %v1399
      %v1511 = vpop.f32.mrf.mxu0
      %v1512 = vadd.f32 0.0, %v1511
      %1513 = vmatmul.f32.gmra.mxu0 %v1401
      %v1514 = vpop.f32.mrf.mxu0
      %v1515 = vadd.f32 0.0, %v1514
      %1516 = vmatmul.f32.gmra.mxu0 %v1403
      %v1517 = vpop.f32.mrf.mxu0
      %v1518 = vadd.f32 0.0, %v1517
      %1519 = vmatmul.f32.gmra.mxu0 %v1405
      %v1520 = vpop.f32.mrf.mxu0
      %v1521 = vadd.f32 0.0, %v1520
      %1522 = vdwg.mxu0
      %v1523 = vadd.f32 %v1356, %v1428
      %v1524 = vadd.f32 %v1357, %v1431
      %v1525 = vadd.f32 %v1358, %v1434
      %v1526 = vadd.f32 %v1359, %v1437
      %v1527 = vadd.f32 %v1360, %v1440
      %v1528 = vadd.f32 %v1361, %v1443
      %v1529 = vadd.f32 %v1362, %v1446
      %v1530 = vadd.f32 %v1363, %v1449
      %v1531 = vadd.f32 %v1364, %v1452
      %v1532 = vadd.f32 %v1365, %v1455
      %v1533 = vadd.f32 %v1366, %v1458
      %v1534 = vadd.f32 %v1367, %v1461
      %v1535 = vadd.f32 %v1368, %v1464
      %v1536 = vadd.f32 %v1369, %v1467
      %v1537 = vadd.f32 %v1370, %v1470
      %v1538 = vadd.f32 %v1371, %v1473
      %v1539 = vadd.f32 %v1372, %v1476
      %v1540 = vadd.f32 %v1373, %v1479
      %v1541 = vadd.f32 %v1374, %v1482
      %v1542 = vadd.f32 %v1375, %v1485
      %v1543 = vadd.f32 %v1376, %v1488
      %v1544 = vadd.f32 %v1377, %v1491
      %v1545 = vadd.f32 %v1378, %v1494
      %v1546 = vadd.f32 %v1379, %v1497
      %v1547 = vadd.f32 %v1380, %v1500
      %v1548 = vadd.f32 %v1381, %v1503
      %v1549 = vadd.f32 %v1382, %v1506
      %v1550 = vadd.f32 %v1383, %v1509
      %v1551 = vadd.f32 %v1384, %v1512
      %v1552 = vadd.f32 %v1385, %v1515
      %v1553 = vadd.f32 %v1386, %v1518
      %v1554 = vadd.f32 %v1387, %v1521
      %s1555 = scalar_lea.vmem %s1, 24
      %v1556 = vld [vmem:[%s1555] sm:$0xf]
      %v1558 = vsel %vm409, %v288, 0
      %v1561 = vsel %vm409, %v289, 0
      %v1564 = vsel %vm409, %v290, 0
      %v1567 = vsel %vm409, %v291, 0
      %v1570 = vsel %vm474, %v1556, 0
      %1572 = vmatpush.msra.mxu0 0.0
      %1573 = vmatpush.msra.mxu0 0.0
      %1574 = vmatpush.msra.mxu0 0.0
      %1575 = vmatpush.msra.mxu0 0.0
      %1576 = vmatpush.msra.mxu0 0.0
      %1577 = vmatpush.msra.mxu0 0.0
      %1578 = vmatpush.msra.mxu0 0.0
      %1579 = vmatpush.msra.mxu0 0.0
      %1580 = vmatpush.msra.mxu0 0.0
      %1581 = vmatpush.msra.mxu0 0.0
      %1582 = vmatpush.msra.mxu0 0.0
      %1583 = vmatpush.msra.mxu0 0.0
      %1584 = vmatpush.msra.mxu0 0.0
      %1585 = vmatpush.msra.mxu0 0.0
      %1586 = vmatpush.msra.mxu0 0.0
      %1587 = vmatpush.msra.mxu0 %v1570
      %1588 = vmatmul.f32.gmra.mxu0 %v607
      %v1589 = vpop.f32.mrf.mxu0
      %v1590 = vadd.f32 0.0, %v1589
      %1591 = vmatmul.f32.gmra.mxu0 %v609
      %v1592 = vpop.f32.mrf.mxu0
      %v1593 = vadd.f32 0.0, %v1592
      %1594 = vmatmul.f32.gmra.mxu0 %v611
      %v1595 = vpop.f32.mrf.mxu0
      %v1596 = vadd.f32 0.0, %v1595
      %1597 = vmatmul.f32.gmra.mxu0 %v613
      %v1598 = vpop.f32.mrf.mxu0
      %v1599 = vadd.f32 0.0, %v1598
      %1600 = vmatmul.f32.gmra.mxu0 %v615
      %v1601 = vpop.f32.mrf.mxu0
      %v1602 = vadd.f32 0.0, %v1601
      %1603 = vmatmul.f32.gmra.mxu0 %v617
      %v1604 = vpop.f32.mrf.mxu0
      %v1605 = vadd.f32 0.0, %v1604
      %1606 = vmatmul.f32.gmra.mxu0 %v619
      %v1607 = vpop.f32.mrf.mxu0
      %v1608 = vadd.f32 0.0, %v1607
      %1609 = vmatmul.f32.gmra.mxu0 %v621
      %v1610 = vpop.f32.mrf.mxu0
      %v1611 = vadd.f32 0.0, %v1610
      %1612 = vmatmul.f32.gmra.mxu0 %v623
      %v1613 = vpop.f32.mrf.mxu0
      %v1614 = vadd.f32 0.0, %v1613
      %1615 = vmatmul.f32.gmra.mxu0 %v625
      %v1616 = vpop.f32.mrf.mxu0
      %v1617 = vadd.f32 0.0, %v1616
      %1618 = vmatmul.f32.gmra.mxu0 %v627
      %v1619 = vpop.f32.mrf.mxu0
      %v1620 = vadd.f32 0.0, %v1619
      %1621 = vmatmul.f32.gmra.mxu0 %v629
      %v1622 = vpop.f32.mrf.mxu0
      %v1623 = vadd.f32 0.0, %v1622
      %1624 = vmatmul.f32.gmra.mxu0 %v631
      %v1625 = vpop.f32.mrf.mxu0
      %v1626 = vadd.f32 0.0, %v1625
      %1627 = vmatmul.f32.gmra.mxu0 %v633
      %v1628 = vpop.f32.mrf.mxu0
      %v1629 = vadd.f32 0.0, %v1628
      %1630 = vmatmul.f32.gmra.mxu0 %v635
      %v1631 = vpop.f32.mrf.mxu0
      %v1632 = vadd.f32 0.0, %v1631
      %1633 = vmatmul.f32.gmra.mxu0 %v637
      %v1634 = vpop.f32.mrf.mxu0
      %v1635 = vadd.f32 0.0, %v1634
      %1636 = vmatmul.f32.gmra.mxu0 %v639
      %v1637 = vpop.f32.mrf.mxu0
      %v1638 = vadd.f32 0.0, %v1637
      %1639 = vmatmul.f32.gmra.mxu0 %v641
      %v1640 = vpop.f32.mrf.mxu0
      %v1641 = vadd.f32 0.0, %v1640
      %1642 = vmatmul.f32.gmra.mxu0 %v643
      %v1643 = vpop.f32.mrf.mxu0
      %v1644 = vadd.f32 0.0, %v1643
      %1645 = vmatmul.f32.gmra.mxu0 %v645
      %v1646 = vpop.f32.mrf.mxu0
      %v1647 = vadd.f32 0.0, %v1646
      %1648 = vmatmul.f32.gmra.mxu0 %v647
      %v1649 = vpop.f32.mrf.mxu0
      %v1650 = vadd.f32 0.0, %v1649
      %1651 = vmatmul.f32.gmra.mxu0 %v649
      %v1652 = vpop.f32.mrf.mxu0
      %v1653 = vadd.f32 0.0, %v1652
      %1654 = vmatmul.f32.gmra.mxu0 %v651
      %v1655 = vpop.f32.mrf.mxu0
      %v1656 = vadd.f32 0.0, %v1655
      %1657 = vmatmul.f32.gmra.mxu0 %v653
      %v1658 = vpop.f32.mrf.mxu0
      %v1659 = vadd.f32 0.0, %v1658
      %1660 = vmatmul.f32.gmra.mxu0 %v1061
      %v1661 = vpop.f32.mrf.mxu0
      %v1662 = vadd.f32 0.0, %v1661
      %1663 = vmatmul.f32.gmra.mxu0 %v1064
      %v1664 = vpop.f32.mrf.mxu0
      %v1665 = vadd.f32 0.0, %v1664
      %1666 = vmatmul.f32.gmra.mxu0 %v1067
      %v1667 = vpop.f32.mrf.mxu0
      %v1668 = vadd.f32 0.0, %v1667
      %1669 = vmatmul.f32.gmra.mxu0 %v1070
      %v1670 = vpop.f32.mrf.mxu0
      %v1671 = vadd.f32 0.0, %v1670
      %1672 = vmatmul.f32.gmra.mxu0 %v1558
      %v1673 = vpop.f32.mrf.mxu0
      %v1674 = vadd.f32 0.0, %v1673
      %1675 = vmatmul.f32.gmra.mxu0 %v1561
      %v1676 = vpop.f32.mrf.mxu0
      %v1677 = vadd.f32 0.0, %v1676
      %1678 = vmatmul.f32.gmra.mxu0 %v1564
      %v1679 = vpop.f32.mrf.mxu0
      %v1680 = vadd.f32 0.0, %v1679
      %1681 = vmatmul.f32.gmra.mxu0 %v1567
      %v1682 = vpop.f32.mrf.mxu0
      %v1683 = vadd.f32 0.0, %v1682
      %1684 = vdwg.mxu0
      %v1685 = vadd.f32 %v1523, %v1590
      %v1686 = vadd.f32 %v1524, %v1593
      %v1687 = vadd.f32 %v1525, %v1596
      %v1688 = vadd.f32 %v1526, %v1599
      %v1689 = vadd.f32 %v1527, %v1602
      %v1690 = vadd.f32 %v1528, %v1605
      %v1691 = vadd.f32 %v1529, %v1608
      %v1692 = vadd.f32 %v1530, %v1611
      %v1693 = vadd.f32 %v1531, %v1614
      %v1694 = vadd.f32 %v1532, %v1617
      %v1695 = vadd.f32 %v1533, %v1620
      %v1696 = vadd.f32 %v1534, %v1623
      %v1697 = vadd.f32 %v1535, %v1626
      %v1698 = vadd.f32 %v1536, %v1629
      %v1699 = vadd.f32 %v1537, %v1632
      %v1700 = vadd.f32 %v1538, %v1635
      %v1701 = vadd.f32 %v1539, %v1638
      %v1702 = vadd.f32 %v1540, %v1641
      %v1703 = vadd.f32 %v1541, %v1644
      %v1704 = vadd.f32 %v1542, %v1647
      %v1705 = vadd.f32 %v1543, %v1650
      %v1706 = vadd.f32 %v1544, %v1653
      %v1707 = vadd.f32 %v1545, %v1656
      %v1708 = vadd.f32 %v1546, %v1659
      %v1709 = vadd.f32 %v1547, %v1662
      %v1710 = vadd.f32 %v1548, %v1665
      %v1711 = vadd.f32 %v1549, %v1668
      %v1712 = vadd.f32 %v1550, %v1671
      %v1713 = vadd.f32 %v1551, %v1674
      %v1714 = vadd.f32 %v1552, %v1677
      %v1715 = vadd.f32 %v1553, %v1680
      %v1716 = vadd.f32 %v1554, %v1683
      %v1718 = vrot.slane %v288, 1
      %v1719 = vrot.slane %v289, 1
      %v1720 = vsel %vm334, %v1718, %v1719
      %v1721 = vrot.slane %v290, 1
      %v1722 = vsel %vm334, %v1719, %v1721
      %v1723 = vrot.slane %v291, 1
      %v1724 = vsel %vm334, %v1721, %v1723
      %v1725 = vrot.slane %v292, 1
      %v1726 = vsel %vm334, %v1723, %v1725
      %s1727 = scalar_lea.vmem %s1, 28
      %v1728 = vld [vmem:[%s1727] sm:$0xf]
      %v1729 = vsel %vm409, %v1720, 0
      %v1731 = vsel %vm409, %v1722, 0
      %v1733 = vsel %vm409, %v1724, 0
      %v1735 = vsel %vm409, %v1726, 0
      %v1738 = vsel %vm474, %v1728, 0
      %1740 = vmatpush.msra.mxu0 0.0
      %1741 = vmatpush.msra.mxu0 0.0
      %1742 = vmatpush.msra.mxu0 0.0
      %1743 = vmatpush.msra.mxu0 0.0
      %1744 = vmatpush.msra.mxu0 0.0
      %1745 = vmatpush.msra.mxu0 0.0
      %1746 = vmatpush.msra.mxu0 0.0
      %1747 = vmatpush.msra.mxu0 0.0
      %1748 = vmatpush.msra.mxu0 0.0
      %1749 = vmatpush.msra.mxu0 0.0
      %1750 = vmatpush.msra.mxu0 0.0
      %1751 = vmatpush.msra.mxu0 0.0
      %1752 = vmatpush.msra.mxu0 0.0
      %1753 = vmatpush.msra.mxu0 0.0
      %1754 = vmatpush.msra.mxu0 0.0
      %1755 = vmatpush.msra.mxu0 %v1738
      %1756 = vmatmul.f32.gmra.mxu0 %v426
      %v1757 = vpop.f32.mrf.mxu0
      %v1758 = vadd.f32 0.0, %v1757
      %1759 = vmatmul.f32.gmra.mxu0 %v428
      %v1760 = vpop.f32.mrf.mxu0
      %v1761 = vadd.f32 0.0, %v1760
      %1762 = vmatmul.f32.gmra.mxu0 %v430
      %v1763 = vpop.f32.mrf.mxu0
      %v1764 = vadd.f32 0.0, %v1763
      %1765 = vmatmul.f32.gmra.mxu0 %v432
      %v1766 = vpop.f32.mrf.mxu0
      %v1767 = vadd.f32 0.0, %v1766
      %1768 = vmatmul.f32.gmra.mxu0 %v434
      %v1769 = vpop.f32.mrf.mxu0
      %v1770 = vadd.f32 0.0, %v1769
      %1771 = vmatmul.f32.gmra.mxu0 %v436
      %v1772 = vpop.f32.mrf.mxu0
      %v1773 = vadd.f32 0.0, %v1772
      %1774 = vmatmul.f32.gmra.mxu0 %v438
      %v1775 = vpop.f32.mrf.mxu0
      %v1776 = vadd.f32 0.0, %v1775
      %1777 = vmatmul.f32.gmra.mxu0 %v440
      %v1778 = vpop.f32.mrf.mxu0
      %v1779 = vadd.f32 0.0, %v1778
      %1780 = vmatmul.f32.gmra.mxu0 %v442
      %v1781 = vpop.f32.mrf.mxu0
      %v1782 = vadd.f32 0.0, %v1781
      %1783 = vmatmul.f32.gmra.mxu0 %v444
      %v1784 = vpop.f32.mrf.mxu0
      %v1785 = vadd.f32 0.0, %v1784
      %1786 = vmatmul.f32.gmra.mxu0 %v446
      %v1787 = vpop.f32.mrf.mxu0
      %v1788 = vadd.f32 0.0, %v1787
      %1789 = vmatmul.f32.gmra.mxu0 %v448
      %v1790 = vpop.f32.mrf.mxu0
      %v1791 = vadd.f32 0.0, %v1790
      %1792 = vmatmul.f32.gmra.mxu0 %v450
      %v1793 = vpop.f32.mrf.mxu0
      %v1794 = vadd.f32 0.0, %v1793
      %1795 = vmatmul.f32.gmra.mxu0 %v452
      %v1796 = vpop.f32.mrf.mxu0
      %v1797 = vadd.f32 0.0, %v1796
      %1798 = vmatmul.f32.gmra.mxu0 %v454
      %v1799 = vpop.f32.mrf.mxu0
      %v1800 = vadd.f32 0.0, %v1799
      %1801 = vmatmul.f32.gmra.mxu0 %v456
      %v1802 = vpop.f32.mrf.mxu0
      %v1803 = vadd.f32 0.0, %v1802
      %1804 = vmatmul.f32.gmra.mxu0 %v458
      %v1805 = vpop.f32.mrf.mxu0
      %v1806 = vadd.f32 0.0, %v1805
      %1807 = vmatmul.f32.gmra.mxu0 %v460
      %v1808 = vpop.f32.mrf.mxu0
      %v1809 = vadd.f32 0.0, %v1808
      %1810 = vmatmul.f32.gmra.mxu0 %v462
      %v1811 = vpop.f32.mrf.mxu0
      %v1812 = vadd.f32 0.0, %v1811
      %1813 = vmatmul.f32.gmra.mxu0 %v464
      %v1814 = vpop.f32.mrf.mxu0
      %v1815 = vadd.f32 0.0, %v1814
      %1816 = vmatmul.f32.gmra.mxu0 %v466
      %v1817 = vpop.f32.mrf.mxu0
      %v1818 = vadd.f32 0.0, %v1817
      %1819 = vmatmul.f32.gmra.mxu0 %v468
      %v1820 = vpop.f32.mrf.mxu0
      %v1821 = vadd.f32 0.0, %v1820
      %1822 = vmatmul.f32.gmra.mxu0 %v470
      %v1823 = vpop.f32.mrf.mxu0
      %v1824 = vadd.f32 0.0, %v1823
      %1825 = vmatmul.f32.gmra.mxu0 %v472
      %v1826 = vpop.f32.mrf.mxu0
      %v1827 = vadd.f32 0.0, %v1826
      %1828 = vmatmul.f32.gmra.mxu0 %v1232
      %v1829 = vpop.f32.mrf.mxu0
      %v1830 = vadd.f32 0.0, %v1829
      %1831 = vmatmul.f32.gmra.mxu0 %v1234
      %v1832 = vpop.f32.mrf.mxu0
      %v1833 = vadd.f32 0.0, %v1832
      %1834 = vmatmul.f32.gmra.mxu0 %v1236
      %v1835 = vpop.f32.mrf.mxu0
      %v1836 = vadd.f32 0.0, %v1835
      %1837 = vmatmul.f32.gmra.mxu0 %v1238
      %v1838 = vpop.f32.mrf.mxu0
      %v1839 = vadd.f32 0.0, %v1838
      %1840 = vmatmul.f32.gmra.mxu0 %v1729
      %v1841 = vpop.f32.mrf.mxu0
      %v1842 = vadd.f32 0.0, %v1841
      %1843 = vmatmul.f32.gmra.mxu0 %v1731
      %v1844 = vpop.f32.mrf.mxu0
      %v1845 = vadd.f32 0.0, %v1844
      %1846 = vmatmul.f32.gmra.mxu0 %v1733
      %v1847 = vpop.f32.mrf.mxu0
      %v1848 = vadd.f32 0.0, %v1847
      %1849 = vmatmul.f32.gmra.mxu0 %v1735
      %v1850 = vpop.f32.mrf.mxu0
      %v1851 = vadd.f32 0.0, %v1850
      %1852 = vdwg.mxu0
      %v1853 = vadd.f32 %v1685, %v1758
      %v1854 = vadd.f32 %v1686, %v1761
      %v1855 = vadd.f32 %v1687, %v1764
      %v1856 = vadd.f32 %v1688, %v1767
      %v1857 = vadd.f32 %v1689, %v1770
      %v1858 = vadd.f32 %v1690, %v1773
      %v1859 = vadd.f32 %v1691, %v1776
      %v1860 = vadd.f32 %v1692, %v1779
      %v1861 = vadd.f32 %v1693, %v1782
      %v1862 = vadd.f32 %v1694, %v1785
      %v1863 = vadd.f32 %v1695, %v1788
      %v1864 = vadd.f32 %v1696, %v1791
      %v1865 = vadd.f32 %v1697, %v1794
      %v1866 = vadd.f32 %v1698, %v1797
      %v1867 = vadd.f32 %v1699, %v1800
      %v1868 = vadd.f32 %v1700, %v1803
      %v1869 = vadd.f32 %v1701, %v1806
      %v1870 = vadd.f32 %v1702, %v1809
      %v1871 = vadd.f32 %v1703, %v1812
      %v1872 = vadd.f32 %v1704, %v1815
      %v1873 = vadd.f32 %v1705, %v1818
      %v1874 = vadd.f32 %v1706, %v1821
      %v1875 = vadd.f32 %v1707, %v1824
      %v1876 = vadd.f32 %v1708, %v1827
      %v1877 = vadd.f32 %v1709, %v1830
      %v1878 = vadd.f32 %v1710, %v1833
      %v1879 = vadd.f32 %v1711, %v1836
      %v1880 = vadd.f32 %v1712, %v1839
      %v1881 = vadd.f32 %v1713, %v1842
      %v1882 = vadd.f32 %v1714, %v1845
      %v1883 = vadd.f32 %v1715, %v1848
      %v1884 = vadd.f32 %v1716, %v1851
      %v1885 = vrot.slane %v288, 2
      %v1886 = vrot.slane %v289, 2
      %v1887 = vsel %vm771, %v1885, %v1886
      %v1888 = vrot.slane %v290, 2
      %v1889 = vsel %vm771, %v1886, %v1888
      %v1890 = vrot.slane %v291, 2
      %v1891 = vsel %vm771, %v1888, %v1890
      %v1892 = vrot.slane %v292, 2
      %v1893 = vsel %vm771, %v1890, %v1892
      %s1894 = scalar_lea.vmem %s1, 32
      %v1895 = vld [vmem:[%s1894] sm:$0xf]
      %v1896 = vsel %vm409, %v1887, 0
      %v1898 = vsel %vm409, %v1889, 0
      %v1900 = vsel %vm409, %v1891, 0
      %v1902 = vsel %vm409, %v1893, 0
      %v1905 = vsel %vm474, %v1895, 0
      %1907 = vmatpush.msra.mxu0 0.0
      %1908 = vmatpush.msra.mxu0 0.0
      %1909 = vmatpush.msra.mxu0 0.0
      %1910 = vmatpush.msra.mxu0 0.0
      %1911 = vmatpush.msra.mxu0 0.0
      %1912 = vmatpush.msra.mxu0 0.0
      %1913 = vmatpush.msra.mxu0 0.0
      %1914 = vmatpush.msra.mxu0 0.0
      %1915 = vmatpush.msra.mxu0 0.0
      %1916 = vmatpush.msra.mxu0 0.0
      %1917 = vmatpush.msra.mxu0 0.0
      %1918 = vmatpush.msra.mxu0 0.0
      %1919 = vmatpush.msra.mxu0 0.0
      %1920 = vmatpush.msra.mxu0 0.0
      %1921 = vmatpush.msra.mxu0 0.0
      %1922 = vmatpush.msra.mxu0 %v1905
      %1923 = vmatmul.f32.gmra.mxu0 %v862
      %v1924 = vpop.f32.mrf.mxu0
      %v1925 = vadd.f32 0.0, %v1924
      %1926 = vmatmul.f32.gmra.mxu0 %v864
      %v1927 = vpop.f32.mrf.mxu0
      %v1928 = vadd.f32 0.0, %v1927
      %1929 = vmatmul.f32.gmra.mxu0 %v866
      %v1930 = vpop.f32.mrf.mxu0
      %v1931 = vadd.f32 0.0, %v1930
      %1932 = vmatmul.f32.gmra.mxu0 %v868
      %v1933 = vpop.f32.mrf.mxu0
      %v1934 = vadd.f32 0.0, %v1933
      %1935 = vmatmul.f32.gmra.mxu0 %v870
      %v1936 = vpop.f32.mrf.mxu0
      %v1937 = vadd.f32 0.0, %v1936
      %1938 = vmatmul.f32.gmra.mxu0 %v872
      %v1939 = vpop.f32.mrf.mxu0
      %v1940 = vadd.f32 0.0, %v1939
      %1941 = vmatmul.f32.gmra.mxu0 %v874
      %v1942 = vpop.f32.mrf.mxu0
      %v1943 = vadd.f32 0.0, %v1942
      %1944 = vmatmul.f32.gmra.mxu0 %v876
      %v1945 = vpop.f32.mrf.mxu0
      %v1946 = vadd.f32 0.0, %v1945
      %1947 = vmatmul.f32.gmra.mxu0 %v878
      %v1948 = vpop.f32.mrf.mxu0
      %v1949 = vadd.f32 0.0, %v1948
      %1950 = vmatmul.f32.gmra.mxu0 %v880
      %v1951 = vpop.f32.mrf.mxu0
      %v1952 = vadd.f32 0.0, %v1951
      %1953 = vmatmul.f32.gmra.mxu0 %v882
      %v1954 = vpop.f32.mrf.mxu0
      %v1955 = vadd.f32 0.0, %v1954
      %1956 = vmatmul.f32.gmra.mxu0 %v884
      %v1957 = vpop.f32.mrf.mxu0
      %v1958 = vadd.f32 0.0, %v1957
      %1959 = vmatmul.f32.gmra.mxu0 %v886
      %v1960 = vpop.f32.mrf.mxu0
      %v1961 = vadd.f32 0.0, %v1960
      %1962 = vmatmul.f32.gmra.mxu0 %v888
      %v1963 = vpop.f32.mrf.mxu0
      %v1964 = vadd.f32 0.0, %v1963
      %1965 = vmatmul.f32.gmra.mxu0 %v890
      %v1966 = vpop.f32.mrf.mxu0
      %v1967 = vadd.f32 0.0, %v1966
      %1968 = vmatmul.f32.gmra.mxu0 %v892
      %v1969 = vpop.f32.mrf.mxu0
      %v1970 = vadd.f32 0.0, %v1969
      %1971 = vmatmul.f32.gmra.mxu0 %v894
      %v1972 = vpop.f32.mrf.mxu0
      %v1973 = vadd.f32 0.0, %v1972
      %1974 = vmatmul.f32.gmra.mxu0 %v896
      %v1975 = vpop.f32.mrf.mxu0
      %v1976 = vadd.f32 0.0, %v1975
      %1977 = vmatmul.f32.gmra.mxu0 %v898
      %v1978 = vpop.f32.mrf.mxu0
      %v1979 = vadd.f32 0.0, %v1978
      %1980 = vmatmul.f32.gmra.mxu0 %v900
      %v1981 = vpop.f32.mrf.mxu0
      %v1982 = vadd.f32 0.0, %v1981
      %1983 = vmatmul.f32.gmra.mxu0 %v902
      %v1984 = vpop.f32.mrf.mxu0
      %v1985 = vadd.f32 0.0, %v1984
      %1986 = vmatmul.f32.gmra.mxu0 %v904
      %v1987 = vpop.f32.mrf.mxu0
      %v1988 = vadd.f32 0.0, %v1987
      %1989 = vmatmul.f32.gmra.mxu0 %v906
      %v1990 = vpop.f32.mrf.mxu0
      %v1991 = vadd.f32 0.0, %v1990
      %1992 = vmatmul.f32.gmra.mxu0 %v908
      %v1993 = vpop.f32.mrf.mxu0
      %v1994 = vadd.f32 0.0, %v1993
      %1995 = vmatmul.f32.gmra.mxu0 %v1399
      %v1996 = vpop.f32.mrf.mxu0
      %v1997 = vadd.f32 0.0, %v1996
      %1998 = vmatmul.f32.gmra.mxu0 %v1401
      %v1999 = vpop.f32.mrf.mxu0
      %v2000 = vadd.f32 0.0, %v1999
      %2001 = vmatmul.f32.gmra.mxu0 %v1403
      %v2002 = vpop.f32.mrf.mxu0
      %v2003 = vadd.f32 0.0, %v2002
      %2004 = vmatmul.f32.gmra.mxu0 %v1405
      %v2005 = vpop.f32.mrf.mxu0
      %v2006 = vadd.f32 0.0, %v2005
      %2007 = vmatmul.f32.gmra.mxu0 %v1896
      %v2008 = vpop.f32.mrf.mxu0
      %v2009 = vadd.f32 0.0, %v2008
      %2010 = vmatmul.f32.gmra.mxu0 %v1898
      %v2011 = vpop.f32.mrf.mxu0
      %v2012 = vadd.f32 0.0, %v2011
      %2013 = vmatmul.f32.gmra.mxu0 %v1900
      %v2014 = vpop.f32.mrf.mxu0
      %v2015 = vadd.f32 0.0, %v2014
      %2016 = vmatmul.f32.gmra.mxu0 %v1902
      %v2017 = vpop.f32.mrf.mxu0
      %v2018 = vadd.f32 0.0, %v2017
      %2019 = vdwg.mxu0
      %v2020 = vadd.f32 %v1853, %v1925
      %v2021 = vadd.f32 %v1854, %v1928
      %v2022 = vadd.f32 %v1855, %v1931
      %v2023 = vadd.f32 %v1856, %v1934
      %v2024 = vadd.f32 %v1857, %v1937
      %v2025 = vadd.f32 %v1858, %v1940
      %v2026 = vadd.f32 %v1859, %v1943
      %v2027 = vadd.f32 %v1860, %v1946
      %v2028 = vadd.f32 %v1861, %v1949
      %v2029 = vadd.f32 %v1862, %v1952
      %v2030 = vadd.f32 %v1863, %v1955
      %v2031 = vadd.f32 %v1864, %v1958
      %v2032 = vadd.f32 %v1865, %v1961
      %v2033 = vadd.f32 %v1866, %v1964
      %v2034 = vadd.f32 %v1867, %v1967
      %v2035 = vadd.f32 %v1868, %v1970
      %v2036 = vadd.f32 %v1869, %v1973
      %v2037 = vadd.f32 %v1870, %v1976
      %v2038 = vadd.f32 %v1871, %v1979
      %v2039 = vadd.f32 %v1872, %v1982
      %v2040 = vadd.f32 %v1873, %v1985
      %v2041 = vadd.f32 %v1874, %v1988
      %v2042 = vadd.f32 %v1875, %v1991
      %v2043 = vadd.f32 %v1876, %v1994
      %v2044 = vadd.f32 %v1877, %v1997
      %v2045 = vadd.f32 %v1878, %v2000
      %v2046 = vadd.f32 %v1879, %v2003
      %v2047 = vadd.f32 %v1880, %v2006
      %v2048 = vadd.f32 %v1881, %v2009
      %v2049 = vadd.f32 %v1882, %v2012
      %v2050 = vadd.f32 %v1883, %v2015
      %v2051 = vadd.f32 %v1884, %v2018
      %2052 = vst [vmem:[%s232] sm:$0xff] %v2020
      %2053 = vst [vmem:[%s232 + $0x8] sm:$0xff] %v2021
      %2054 = vst [vmem:[%s232 + $0x10] sm:$0xff] %v2022
      %2055 = vst [vmem:[%s232 + $0x18] sm:$0xff] %v2023
      %2056 = vst [vmem:[%s232 + $0x20] sm:$0xff] %v2024
      %2057 = vst [vmem:[%s232 + $0x28] sm:$0xff] %v2025
      %2058 = vst [vmem:[%s232 + $0x30] sm:$0xff] %v2026
      %2059 = vst [vmem:[%s232 + $0x38] sm:$0xff] %v2027
      %2060 = vst [vmem:[%s232 + $0x40] sm:$0xff] %v2028
      %2061 = vst [vmem:[%s232 + $0x48] sm:$0xff] %v2029
      %2062 = vst [vmem:[%s232 + $0x50] sm:$0xff] %v2030
      %2063 = vst [vmem:[%s232 + $0x58] sm:$0xff] %v2031
      %2064 = vst [vmem:[%s232 + $0x60] sm:$0xff] %v2032
      %2065 = vst [vmem:[%s232 + $0x68] sm:$0xff] %v2033
      %2066 = vst [vmem:[%s232 + $0x70] sm:$0xff] %v2034
      %2067 = vst [vmem:[%s232 + $0x78] sm:$0xff] %v2035
      %2068 = vst [vmem:[%s232 + $0x80] sm:$0xff] %v2036
      %2069 = vst [vmem:[%s232 + $0x88] sm:$0xff] %v2037
      %2070 = vst [vmem:[%s232 + $0x90] sm:$0xff] %v2038
      %2071 = vst [vmem:[%s232 + $0x98] sm:$0xff] %v2039
      %2072 = vst [vmem:[%s232 + $0xa0] sm:$0xff] %v2040
      %2073 = vst [vmem:[%s232 + $0xa8] sm:$0xff] %v2041
      %2074 = vst [vmem:[%s232 + $0xb0] sm:$0xff] %v2042
      %2075 = vst [vmem:[%s232 + $0xb8] sm:$0xff] %v2043
      %2076 = vst [vmem:[%s232 + $0xc0] sm:$0xff] %v2044
      %2077 = vst [vmem:[%s232 + $0xc8] sm:$0xff] %v2045
      %2078 = vst [vmem:[%s232 + $0xd0] sm:$0xff] %v2046
      %2079 = vst [vmem:[%s232 + $0xd8] sm:$0xff] %v2047
      %2080 = vst [vmem:[%s232 + $0xe0] sm:$0xff] %v2048
      %2081 = vst [vmem:[%s232 + $0xe8] sm:$0xff] %v2049
      %2082 = vst [vmem:[%s232 + $0xf0] sm:$0xff] %v2050
      %2083 = vst [vmem:[%s232 + $0xf8] sm:$0xff] %v2051
      %p2084 = scmp.eq.s32.totalorder %s21, 0
      // Predicated region
      $region29: #{up_block.2} parent=27 // pred_check
        %p2085 = pneg %p2084
      $region30: #{up_block.2} parent=27 // pred_check_branch
        %2087 = sbr.rel (%p2085) target = $region32
      $region31: #{up_block.2} parent=27 // pred_region
        %2088 = vst [vmem:[%s236] sm:$0x1] 0.0
        %2089 = vst [vmem:[%s239] sm:$0x1] 0.0
      $region32: #{up_block.2} parent=27 // pred_fallthru
        _
      %v2090 = vld [vmem:[%s236] sm:$0x1]
      %v2091 = vadd.f32 %v2020, %v2021
      %v2092 = vadd.f32 %v2091, %v2022
      %v2093 = vadd.f32 %v2092, %v2023
      %v2094 = vadd.f32 %v2093, %v2024
      %v2095 = vadd.f32 %v2094, %v2025
      %v2096 = vadd.f32 %v2095, %v2026
      %v2097 = vadd.f32 %v2096, %v2027
      %v2098 = vadd.f32 %v2097, %v2028
      %v2099 = vadd.f32 %v2098, %v2029
      %v2100 = vadd.f32 %v2099, %v2030
      %v2101 = vadd.f32 %v2100, %v2031
      %v2102 = vadd.f32 %v2101, %v2032
      %v2103 = vadd.f32 %v2102, %v2033
      %v2104 = vadd.f32 %v2103, %v2034
      %v2105 = vadd.f32 %v2104, %v2035
      %v2106 = vadd.f32 %v2105, %v2036
      %v2107 = vadd.f32 %v2106, %v2037
      %v2108 = vadd.f32 %v2107, %v2038
      %v2109 = vadd.f32 %v2108, %v2039
      %v2110 = vadd.f32 %v2109, %v2040
      %v2111 = vadd.f32 %v2110, %v2041
      %v2112 = vadd.f32 %v2111, %v2042
      %v2113 = vadd.f32 %v2112, %v2043
      %v2114 = vadd.f32 %v2113, %v2044
      %v2115 = vadd.f32 %v2114, %v2045
      %v2116 = vadd.f32 %v2115, %v2046
      %v2117 = vadd.f32 %v2116, %v2047
      %v2118 = vadd.f32 %v2117, %v2048
      %v2119 = vadd.f32 %v2118, %v2049
      %v2120 = vadd.f32 %v2119, %v2050
      %v2121 = vadd.f32 %v2120, %v2051
      %v2122 = vrot.slane %v2121, 4
      %v2123 = vadd.f32 %v2121, %v2122
      %v2124 = vrot.slane %v2123, 2
      %v2125 = vadd.f32 %v2123, %v2124
      %v2126 = vrot.slane %v2125, 1
      %v2127 = vadd.f32 %v2125, %v2126
      %v2128 = vadd.f32 %v2090, %v2127
      %2129 = vst [vmem:[%s236] sm:$0x1] %v2128
      %v2130 = vld [vmem:[%s239] sm:$0x1]
      %v2131 = vmul.f32 %v2020, %v2020
      %v2132 = vmul.f32 %v2021, %v2021
      %v2133 = vmul.f32 %v2022, %v2022
      %v2134 = vmul.f32 %v2023, %v2023
      %v2135 = vmul.f32 %v2024, %v2024
      %v2136 = vmul.f32 %v2025, %v2025
      %v2137 = vmul.f32 %v2026, %v2026
      %v2138 = vmul.f32 %v2027, %v2027
      %v2139 = vmul.f32 %v2028, %v2028
      %v2140 = vmul.f32 %v2029, %v2029
      %v2141 = vmul.f32 %v2030, %v2030
      %v2142 = vmul.f32 %v2031, %v2031
      %v2143 = vmul.f32 %v2032, %v2032
      %v2144 = vmul.f32 %v2033, %v2033
      %v2145 = vmul.f32 %v2034, %v2034
      %v2146 = vmul.f32 %v2035, %v2035
      %v2147 = vmul.f32 %v2036, %v2036
      %v2148 = vmul.f32 %v2037, %v2037
      %v2149 = vmul.f32 %v2038, %v2038
      %v2150 = vmul.f32 %v2039, %v2039
      %v2151 = vmul.f32 %v2040, %v2040
      %v2152 = vmul.f32 %v2041, %v2041
      %v2153 = vmul.f32 %v2042, %v2042
      %v2154 = vmul.f32 %v2043, %v2043
      %v2155 = vmul.f32 %v2044, %v2044
      %v2156 = vmul.f32 %v2045, %v2045
      %v2157 = vmul.f32 %v2046, %v2046
      %v2158 = vmul.f32 %v2047, %v2047
      %v2159 = vmul.f32 %v2048, %v2048
      %v2160 = vmul.f32 %v2049, %v2049
      %v2161 = vmul.f32 %v2050, %v2050
      %v2162 = vmul.f32 %v2051, %v2051
      %v2163 = vadd.f32 %v2131, %v2132
      %v2164 = vadd.f32 %v2163, %v2133
      %v2165 = vadd.f32 %v2164, %v2134
      %v2166 = vadd.f32 %v2165, %v2135
      %v2167 = vadd.f32 %v2166, %v2136
      %v2168 = vadd.f32 %v2167, %v2137
      %v2169 = vadd.f32 %v2168, %v2138
      %v2170 = vadd.f32 %v2169, %v2139
      %v2171 = vadd.f32 %v2170, %v2140
      %v2172 = vadd.f32 %v2171, %v2141
      %v2173 = vadd.f32 %v2172, %v2142
      %v2174 = vadd.f32 %v2173, %v2143
      %v2175 = vadd.f32 %v2174, %v2144
      %v2176 = vadd.f32 %v2175, %v2145
      %v2177 = vadd.f32 %v2176, %v2146
      %v2178 = vadd.f32 %v2177, %v2147
      %v2179 = vadd.f32 %v2178, %v2148
      %v2180 = vadd.f32 %v2179, %v2149
      %v2181 = vadd.f32 %v2180, %v2150
      %v2182 = vadd.f32 %v2181, %v2151
      %v2183 = vadd.f32 %v2182, %v2152
      %v2184 = vadd.f32 %v2183, %v2153
      %v2185 = vadd.f32 %v2184, %v2154
      %v2186 = vadd.f32 %v2185, %v2155
      %v2187 = vadd.f32 %v2186, %v2156
      %v2188 = vadd.f32 %v2187, %v2157
      %v2189 = vadd.f32 %v2188, %v2158
      %v2190 = vadd.f32 %v2189, %v2159
      %v2191 = vadd.f32 %v2190, %v2160
      %v2192 = vadd.f32 %v2191, %v2161
      %v2193 = vadd.f32 %v2192, %v2162
      %v2194 = vrot.slane %v2193, 4
      %v2195 = vadd.f32 %v2193, %v2194
      %v2196 = vrot.slane %v2195, 2
      %v2197 = vadd.f32 %v2195, %v2196
      %v2198 = vrot.slane %v2197, 1
      %v2199 = vadd.f32 %v2197, %v2198
      %v2200 = vadd.f32 %v2130, %v2199
      %2201 = vst [vmem:[%s239] sm:$0x1] %v2200
      %s2202 = smul.u32 8, %s21
      %p2203 = scmp.lt.s32.totalorder %s20, 1
      %s2204 = scalar_select %p2203, %s20, 1
      %p2205 = scmp.lt.s32.totalorder %s2202, 31
      %s2206 = scalar_select %p2205, %s2202, 31
      %s2207 = smul.addr %s2206, 4
      %s2208 = smul.addr %s2204, 128
      %s2209 = sadd.s32 %s2207, %s2208
      %s2210 = smul.addr %s2209, 8
      %s2211 = scalar_lea.vmem %s2, %s2210
      %p2212 = scmp.lt.s32.totalorder %s20, 1
      %s2213 = scalar_select %p2212, %s20, 1
      %s2214 = scalar_lea.vmem %s3, %s2213
      %p2215 = scmp.lt.s32.totalorder %s20, 1
      %s2216 = scalar_select %p2215, %s20, 1
      %s2217 = scalar_lea.vmem %s4, %s2216
      // Predicated region
      $region33: #{up_block.2} parent=27 // pred_check
        %p2218 = pneg %p95
      $region34: #{up_block.2} parent=27 // pred_check_branch
        %2220 = sbr.rel (%p2218) target = $region36
      $region35: #{up_block.2} parent=27 // pred_region
        %s2221 = smul.u32 8, %s21
      $region36: #{up_block.2} parent=27 // pred_fallthru
        _
      // Predicated region
      $region37: #{up_block.2} parent=27 // pred_check
        %p2222 = pneg %p121
      $region38: #{up_block.2} parent=27 // pred_check_branch
        %2224 = sbr.rel (%p2222) target = $region40
      $region39: #{up_block.2} parent=27 // pred_region
        _
      $region40: #{up_block.2} parent=27 // pred_fallthru
        _
      // Predicated region
      $region41: #{up_block.2} parent=27 // pred_check
        %p2225 = pneg %p147
      $region42: #{up_block.2} parent=27 // pred_check_branch
        %2227 = sbr.rel (%p2225) target = $region44
      $region43: #{up_block.2} parent=27 // pred_region
        _
      $region44: #{up_block.2} parent=27 // pred_fallthru
        _
    $region28: #{up_block.2} parent=5 // pred_fallthru
      _
    %p2228 = scmp.le.s32.totalorder 2, %s11
    // Predicated region
    $region45: #{up_block.2} parent=5 // pred_check
      %p2229 = pneg %p2228
    $region46: #{up_block.2} parent=5 // pred_check_branch
      %2231 = sbr.rel (%p2229) target = $region48
    $region47: #{up_block.2} parent=5 // pred_region
      %s2232 = ssub.s32 %s11, 2
      // Predicated region
      $region49: #{up_block.2} parent=47 // pred_check
        %p2233 = pneg %p101
      $region50: #{up_block.2} parent=47 // pred_check_branch
        %2235 = sbr.rel (%p2233) target = $region52
      $region51: #{up_block.2} parent=47 // pred_region
        %s2236 = smul.u32 8, %s23
        %p2237 = scmp.lt.s32.totalorder %s22, 1
        %s2238 = scalar_select %p2237, %s22, 1
        %p2239 = scmp.lt.s32.totalorder %s2236, 31
        %s2240 = scalar_select %p2239, %s2236, 31
        %s2241 = smul.addr %s2240, 4
        %s2242 = smul.addr %s2238, 128
        %s2243 = sadd.s32 %s2241, %s2242
        %s2244 = smul.addr %s2243, 8
        %s2245 = scalar_lea.vmem %s2, %s2244
      $region52: #{up_block.2} parent=47 // pred_fallthru
        _
      // Predicated region
      $region53: #{up_block.2} parent=47 // pred_check
        %p2246 = pneg %p127
      $region54: #{up_block.2} parent=47 // pred_check_branch
        %2248 = sbr.rel (%p2246) target = $region56
      $region55: #{up_block.2} parent=47 // pred_region
        %p2249 = scmp.lt.s32.totalorder %s22, 1
        %s2250 = scalar_select %p2249, %s22, 1
        %s2251 = scalar_lea.vmem %s3, %s2250
      $region56: #{up_block.2} parent=47 // pred_fallthru
        _
      // Predicated region
      $region57: #{up_block.2} parent=47 // pred_check
        %p2252 = pneg %p153
      $region58: #{up_block.2} parent=47 // pred_check_branch
        %2254 = sbr.rel (%p2252) target = $region60
      $region59: #{up_block.2} parent=47 // pred_region
        %p2255 = scmp.lt.s32.totalorder %s22, 1
        %s2256 = scalar_select %p2255, %s22, 1
        %s2257 = scalar_lea.vmem %s4, %s2256
      $region60: #{up_block.2} parent=47 // pred_fallthru
        _
    $region48: #{up_block.2} parent=5 // pred_fallthru
      _
  $region6: #{up_block.2} parent=0 // loop_footer
    %s15 = sadd.s32 1, %s11
  $region7: #{up_block.2} parent=0 // loop_footer_branch
    %10 = sbr.rel target = $region3
  $region8: #{up_block.2} parent=0 // loop_exit
    _

</llo_original>
